<compile_context>
chip_gen: v6e
topology: v6e:2x2x1
jax: 0.10.0
libtpu: 0.0.40
codegen_flags: <defaults>
</compile_context>

<pallas_src>
import functools

import jax
import jax.numpy as jnp
from jax.experimental import pallas as pl
from jax.experimental.pallas import tpu as pltpu

LANE = 128  # vreg lane width


def _round_up(x, m):
    return (x + m - 1) // m * m


def fusion_kernel(x_ref, wbig_ref, wrest_ref, b_ref, out_ref):
    """One batch tile.

    x_ref   : (TB, 128) f32. Lanes [0:trans_dim) = trans_out, [trans_dim:trans_dim+C) = rf_prob,
              rest zero.
    wbig_ref: (128, 256) f32 slab [w2 | w2 @ wa1], zero-padded.
    wrest_ref: (3, 128, 128) f32 slab [w1, wfc_a, wfc_b(rows shifted to trans_dim)], zero-padded.
    b_ref   : (8, 256) f32 slab. row0 = b1 | 0 ; row1 = b2 | (b2@wa1 + ba1);
              row2 = wa2 row | 0 ; row3 = bfc | 0 ; row4 lane0 = ba2.
    out_ref : (TB, 128) f32, lanes >= num_classes are zero.
    """
    x = x_ref[...]                                                    # (TB, 128)

    # --- trans_adjust layer 0: Linear -> ReLU (Dropout = identity) ---
    h = jnp.maximum(
        jnp.dot(x, wrest_ref[0], preferred_element_type=jnp.float32)
        + b_ref[0:1, 0:LANE], 0.0)                                    # (TB, 128), 16 real lanes

    # --- fused [w2 | w2@wa1]: one wide dot gives trans_adjust output AND attention pre-act ---
    big = (jnp.dot(h, wbig_ref[...], preferred_element_type=jnp.float32)
           + b_ref[1:2, :])                                           # (TB, 256)
    t = big[:, 0:LANE]                                                # trans_adjust output
    a = jnp.maximum(big[:, LANE:2 * LANE], 0.0)                       # attention hidden (ReLU)

    # --- attention head (out_features = 1): VPU multiply + XLU lane reduce, then sigmoid ---
    logit = jnp.sum(a * b_ref[2:3, 0:LANE], axis=-1, keepdims=True) + b_ref[4:5, 0:1]
    alpha = jax.nn.sigmoid(logit)                                     # (TB, 1)

    # --- fused = cat([alpha*t, (1-alpha)*rf]); dropout(id); fc split over the concat ---
    left = alpha * t
    right = (1.0 - alpha) * x      # rf lanes align with wfc_b slab rows; other rows are zero
    out = (jnp.dot(left, wrest_ref[1], preferred_element_type=jnp.float32)
           + jnp.dot(right, wrest_ref[2], preferred_element_type=jnp.float32)
           + b_ref[3:4, 0:LANE])
    out_ref[...] = out.astype(out_ref.dtype)


def _pad2d(x, rows, cols):
    r, c = x.shape
    return jnp.pad(x, ((0, rows - r), (0, cols - c)))


def pack_params(p):
    """Pack all FusionLayer parameters into resident slabs.

    Run ONCE at model-load time (outside the per-call jitted forward).
    Weights are stored as (in, out); attention layer 0 is folded into w2.
    """
    trans_dim = p["w1"].shape[0]
    num_classes = p["w2"].shape[1]
    assert trans_dim + num_classes <= LANE

    # Fold attention layer 0 into w2:  t @ wa1 + ba1 == h @ (w2 @ wa1) + (b2 @ wa1 + ba1)
    w2a = p["w2"] @ p["wa1"]                       # (h, ah)
    ba1p = p["b2"] @ p["wa1"] + p["ba1"]           # (1, ah)

    w_big = jnp.zeros((LANE, 2 * LANE), jnp.float32)
    w_big = w_big.at[:p["w2"].shape[0], :p["w2"].shape[1]].set(p["w2"])
    w_big = w_big.at[:w2a.shape[0], LANE:LANE + w2a.shape[1]].set(w2a)   # (128, 256)

    w1 = _pad2d(p["w1"], LANE, LANE)
    wfc_a = _pad2d(p["wfc_a"], LANE, LANE)
    wfc_b = jnp.zeros((LANE, LANE), jnp.float32)
    # rf_prob lives at lanes [trans_dim, trans_dim+C) of the packed input stream,
    # so wfc_b's real rows go at row offset trans_dim (rows 0..trans_dim-1 stay zero).
    wfc_b = wfc_b.at[trans_dim:trans_dim + p["wfc_b"].shape[0],
                     :p["wfc_b"].shape[1]].set(p["wfc_b"])
    w_rest = jnp.stack([w1, wfc_a, wfc_b]).astype(jnp.float32)           # (3, 128, 128)

    b_slab = jnp.zeros((8, 2 * LANE), jnp.float32)
    b_slab = b_slab.at[0, :p["b1"].size].set(p["b1"].reshape(-1))
    b_slab = b_slab.at[1, :p["b2"].size].set(p["b2"].reshape(-1))
    b_slab = b_slab.at[1, LANE:LANE + ba1p.size].set(ba1p.reshape(-1))
    b_slab = b_slab.at[2, :p["wa2"].size].set(p["wa2"].reshape(-1))
    b_slab = b_slab.at[3, :p["bfc"].size].set(p["bfc"].reshape(-1))
    b_slab = b_slab.at[4, 0].set(p["ba2"].reshape(()))                   # (8, 256)
    return w_big, w_rest, b_slab


def _pick_tb(batch):
    """Generation-aware batch tile: grid=1 on single-TC chips (v5e/v6e) for small B,
    >=2 grid steps on v7x (2 TensorCores/chip); cap tile so VMEM/vregs stay sane."""
    b8 = _round_up(batch, 8)
    try:
        kind = jax.devices()[0].device_kind.lower()
    except Exception:  # pragma: no cover
        kind = ""
    two_tc = "v7" in kind
    if two_tc and b8 >= 16:
        tb = _round_up((b8 + 1) // 2, 8)
    else:
        tb = b8
    return int(max(8, min(tb, 1024)))


@functools.partial(jax.jit, static_argnames=("tb",))
def _forward_impl(trans_out, rf_prob, w_big, w_rest, b_slab, *, tb):
    B, trans_dim = trans_out.shape
    num_classes = rf_prob.shape[1]
    assert trans_dim + num_classes <= LANE

    b_pad = _round_up(B, tb)
    # Single packed activation stream: trans_out | rf_prob | zero lanes.
    x = jnp.concatenate([trans_out.astype(jnp.float32),
                         rf_prob.astype(jnp.float32)], axis=1)
    x = jnp.pad(x, ((0, b_pad - B), (0, LANE - (trans_dim + num_classes))))

    out_pad = pl.pallas_call(
        fusion_kernel,
        out_shape=jax.ShapeDtypeStruct((b_pad, LANE), jnp.float32),
        grid_spec=pltpu.PrefetchScalarGridSpec(
            num_scalar_prefetch=0,
            grid=(b_pad // tb,),
            in_specs=[
                pl.BlockSpec((tb, LANE), lambda i: (i, 0)),            # packed activations
                pl.BlockSpec((LANE, 2 * LANE), lambda i: (0, 0)),      # [w2 | w2@wa1], resident
                pl.BlockSpec((3, LANE, LANE), lambda i: (0, 0, 0)),    # [w1, wfc_a, wfc_b], resident
                pl.BlockSpec((8, 2 * LANE), lambda i: (0, 0)),         # bias/row slab, resident
            ],
            out_specs=pl.BlockSpec((tb, LANE), lambda i: (i, 0)),
        ),
        compiler_params=pltpu.CompilerParams(
            dimension_semantics=("parallel",),    # batch tiles shard across TCs on v7x
        ),
    )(x, w_big, w_rest, b_slab)

    return out_pad[:B, :num_classes]


def fusion_layer_forward(trans_out, rf_prob, w_big, w_rest, b_slab, *, tb=None):
    B = trans_out.shape[0]
    if tb is None:
        tb = _pick_tb(B)
    tb = int(max(8, _round_up(min(tb, _round_up(B, 8)), 8)))
    return _forward_impl(trans_out, rf_prob, w_big, w_rest, b_slab, tb=tb)


def init_params(key, trans_dim, num_classes):
    """Deterministic synthetic parameters (weights stored as (in, out))."""
    h = trans_dim // 2
    ah = num_classes // 2
    ks = jax.random.split(key, 10)
    scale = 0.1
    return {
        "w1": scale * jax.random.normal(ks[0], (trans_dim, h), jnp.float32),
        "b1": scale * jax.random.normal(ks[1], (1, h), jnp.float32),
        "w2": scale * jax.random.normal(ks[2], (h, num_classes), jnp.float32),
        "b2": scale * jax.random.normal(ks[3], (1, num_classes), jnp.float32),
        "wa1": scale * jax.random.normal(ks[4], (num_classes, ah), jnp.float32),
        "ba1": scale * jax.random.normal(ks[5], (1, ah), jnp.float32),
        "wa2": scale * jax.random.normal(ks[6], (ah, 1), jnp.float32),
        "ba2": scale * jax.random.normal(ks[7], (1, 1), jnp.float32),
        # fc weight over the concatenated (2*num_classes) input, split into halves
        "wfc_a": scale * jax.random.normal(ks[8], (num_classes, num_classes), jnp.float32),
        "wfc_b": scale * jax.random.normal(ks[9], (num_classes, num_classes), jnp.float32),
        "bfc": scale * jnp.ones((1, num_classes), jnp.float32),
    }


def reference_forward(trans_out, rf_prob, p):
    """Pure-JAX f32 reference matching the PyTorch forward (eval mode)."""
    h = jnp.maximum(trans_out @ p["w1"] + p["b1"], 0.0)
    t = h @ p["w2"] + p["b2"]
    a = jnp.maximum(t @ p["wa1"] + p["ba1"], 0.0)
    alpha = jax.nn.sigmoid(a @ p["wa2"] + p["ba2"])
    fused = jnp.concatenate([alpha * t, (1.0 - alpha) * rf_prob], axis=1)
    wfc = jnp.concatenate([p["wfc_a"], p["wfc_b"]], axis=0)
    return fused @ wfc + p["bfc"]


if __name__ == "__main__":
    B, trans_dim, num_classes = 256, 32, 8  # rf_dim unused by the forward pass

    key = jax.random.PRNGKey(0)
    k_in, k_rf, k_p = jax.random.split(key, 3)
    trans_out = jax.random.normal(k_in, (B, trans_dim), jnp.float32)
    rf_prob = jax.nn.softmax(jax.random.normal(k_rf, (B, num_classes), jnp.float32), axis=-1)
    params = init_params(k_p, trans_dim, num_classes)

    # Model-load time: pack weights/biases once, outside the per-call forward.
    w_big, w_rest, b_slab = pack_params(params)
    w_big, w_rest, b_slab = jax.block_until_ready((w_big, w_rest, b_slab))

    # TODO(synk): nn.Dropout is stochastic in train mode; implemented as identity (eval semantics).
    out = fusion_layer_forward(trans_out, rf_prob, w_big, w_rest, b_slab)
    out = jax.block_until_ready(out)

    ref = reference_forward(trans_out, rf_prob, params)
    assert out.shape == (B, num_classes)
    # MXU may run f32 operands via bf16 passes at default precision -> modest tolerance.
    err = float(jnp.max(jnp.abs(out - ref)))
    assert err < 5e-2, f"max abs err {err}"

    print("KERNEL_OK")
</pallas_src>

<mosaic_0001>
module attributes {stable_mosaic.version = 11 : i64} {
  func.func @fusion_kernel(%arg0: i32, %arg1: memref<256x128xf32, #tpu.memory_space<vmem>>, %arg2: memref<128x256xf32, #tpu.memory_space<vmem>>, %arg3: memref<3x128x128xf32, #tpu.memory_space<vmem>>, %arg4: memref<8x256xf32, #tpu.memory_space<vmem>>, %arg5: memref<256x128xf32, #tpu.memory_space<vmem>>) attributes {dimension_semantics = [#tpu.dimension_semantics<parallel>], iteration_bounds = array<i64: 1>, scalar_prefetch = 0 : i64, scratch_operands = 0 : i64, tpu.core_type = #tpu.core_type<tc>, window_params = [{transform_indices = @transform_0, window_bounds = array<i64: 256, 128>}, {pipeline_mode = #tpu.pipeline_mode<synchronous>, transform_indices = @transform_1, window_bounds = array<i64: 128, 256>}, {pipeline_mode = #tpu.pipeline_mode<synchronous>, transform_indices = @transform_2, window_bounds = array<i64: 3, 128, 128>}, {pipeline_mode = #tpu.pipeline_mode<synchronous>, transform_indices = @transform_3, window_bounds = array<i64: 8, 256>}, {transform_indices = @transform_4, window_bounds = array<i64: 256, 128>}]} {
    %c0 = arith.constant 0 : index
    %c0_0 = arith.constant 0 : index
    %0 = vector.load %arg1[%c0, %c0_0] : memref<256x128xf32, #tpu.memory_space<vmem>>, vector<256x128xf32>
    %c0_1 = arith.constant 0 : index
    %c0_2 = arith.constant 0 : index
    %c0_3 = arith.constant 0 : index
    %1 = vector.load %arg3[%c0_1, %c0_2, %c0_3] : memref<3x128x128xf32, #tpu.memory_space<vmem>>, vector<1x128x128xf32>
    %2 = vector.shape_cast %1 : vector<1x128x128xf32> to vector<128x128xf32>
    %cst = arith.constant dense<0.000000e+00> : vector<256x128xf32>
    %3 = tpu.matmul %0, %2, %cst {dimension_numbers = #tpu.dot_dimension_numbers<[1], [0], [0], [1], [0, 0, 1, 1], [], []>} : vector<256x128xf32>, vector<128x128xf32>, vector<256x128xf32> -> vector<256x128xf32>
    %c0_4 = arith.constant 0 : index
    %c0_5 = arith.constant 0 : index
    %4 = vector.load %arg4[%c0_4, %c0_5] : memref<8x256xf32, #tpu.memory_space<vmem>>, vector<1x128xf32>
    %5 = vector.broadcast %4 : vector<1x128xf32> to vector<256x128xf32>
    %6 = arith.addf %3, %5 : vector<256x128xf32>
    %cst_6 = arith.constant 0.000000e+00 : f32
    %7 = vector.broadcast %cst_6 : f32 to vector<256x128xf32>
    %8 = arith.maximumf %6, %7 : vector<256x128xf32>
    %c0_7 = arith.constant 0 : index
    %c0_8 = arith.constant 0 : index
    %9 = vector.load %arg2[%c0_7, %c0_8] : memref<128x256xf32, #tpu.memory_space<vmem>>, vector<128x256xf32>
    %cst_9 = arith.constant dense<0.000000e+00> : vector<256x256xf32>
    %10 = tpu.matmul %8, %9, %cst_9 {dimension_numbers = #tpu.dot_dimension_numbers<[1], [0], [0], [1], [0, 0, 1, 1], [], []>} : vector<256x128xf32>, vector<128x256xf32>, vector<256x256xf32> -> vector<256x256xf32>
    %c1 = arith.constant 1 : index
    %c0_10 = arith.constant 0 : index
    %11 = vector.load %arg4[%c1, %c0_10] : memref<8x256xf32, #tpu.memory_space<vmem>>, vector<1x256xf32>
    %12 = vector.broadcast %11 : vector<1x256xf32> to vector<256x256xf32>
    %13 = arith.addf %10, %12 : vector<256x256xf32>
    %14 = vector.extract_strided_slice %13 {offsets = [0, 0], sizes = [256, 128], strides = [1, 1]} : vector<256x256xf32> to vector<256x128xf32>
    %15 = vector.extract_strided_slice %13 {offsets = [0, 128], sizes = [256, 128], strides = [1, 1]} : vector<256x256xf32> to vector<256x128xf32>
    %cst_11 = arith.constant 0.000000e+00 : f32
    %16 = vector.broadcast %cst_11 : f32 to vector<256x128xf32>
    %17 = arith.maximumf %15, %16 : vector<256x128xf32>
    %c2 = arith.constant 2 : index
    %c0_12 = arith.constant 0 : index
    %18 = vector.load %arg4[%c2, %c0_12] : memref<8x256xf32, #tpu.memory_space<vmem>>, vector<1x128xf32>
    %19 = vector.broadcast %18 : vector<1x128xf32> to vector<256x128xf32>
    %20 = arith.mulf %17, %19 : vector<256x128xf32>
    %cst_13 = arith.constant dense<0.000000e+00> : vector<256xf32>
    %21 = vector.multi_reduction <add>, %20, %cst_13 [1] : vector<256x128xf32> to vector<256xf32>
    %22 = vector.shape_cast %21 : vector<256xf32> to vector<256x1xf32>
    %c4 = arith.constant 4 : index
    %c0_14 = arith.constant 0 : index
    %23 = vector.load %arg4[%c4, %c0_14] : memref<8x256xf32, #tpu.memory_space<vmem>>, vector<1x1xf32>
    %24 = vector.broadcast %23 : vector<1x1xf32> to vector<256x1xf32>
    %25 = arith.addf %22, %24 : vector<256x1xf32>
    %26 = arith.negf %25 : vector<256x1xf32>
    %27 = math.exp %26 : vector<256x1xf32>
    %cst_15 = arith.constant 1.000000e+00 : f32
    %28 = vector.broadcast %cst_15 : f32 to vector<256x1xf32>
    %29 = arith.addf %28, %27 : vector<256x1xf32>
    %30 = arith.divf %28, %29 : vector<256x1xf32>
    %31 = vector.broadcast %30 : vector<256x1xf32> to vector<256x128xf32>
    %32 = arith.mulf %31, %14 : vector<256x128xf32>
    %cst_16 = arith.constant 1.000000e+00 : f32
    %33 = vector.broadcast %cst_16 : f32 to vector<256x1xf32>
    %34 = arith.subf %33, %30 : vector<256x1xf32>
    %35 = vector.broadcast %34 : vector<256x1xf32> to vector<256x128xf32>
    %36 = arith.mulf %35, %0 : vector<256x128xf32>
    %c1_17 = arith.constant 1 : index
    %c0_18 = arith.constant 0 : index
    %c0_19 = arith.constant 0 : index
    %37 = vector.load %arg3[%c1_17, %c0_18, %c0_19] : memref<3x128x128xf32, #tpu.memory_space<vmem>>, vector<1x128x128xf32>
    %38 = vector.shape_cast %37 : vector<1x128x128xf32> to vector<128x128xf32>
    %cst_20 = arith.constant dense<0.000000e+00> : vector<256x128xf32>
    %39 = tpu.matmul %32, %38, %cst_20 {dimension_numbers = #tpu.dot_dimension_numbers<[1], [0], [0], [1], [0, 0, 1, 1], [], []>} : vector<256x128xf32>, vector<128x128xf32>, vector<256x128xf32> -> vector<256x128xf32>
    %c2_21 = arith.constant 2 : index
    %c0_22 = arith.constant 0 : index
    %c0_23 = arith.constant 0 : index
    %40 = vector.load %arg3[%c2_21, %c0_22, %c0_23] : memref<3x128x128xf32, #tpu.memory_space<vmem>>, vector<1x128x128xf32>
    %41 = vector.shape_cast %40 : vector<1x128x128xf32> to vector<128x128xf32>
    %cst_24 = arith.constant dense<0.000000e+00> : vector<256x128xf32>
    %42 = tpu.matmul %36, %41, %cst_24 {dimension_numbers = #tpu.dot_dimension_numbers<[1], [0], [0], [1], [0, 0, 1, 1], [], []>} : vector<256x128xf32>, vector<128x128xf32>, vector<256x128xf32> -> vector<256x128xf32>
    %43 = arith.addf %39, %42 : vector<256x128xf32>
    %c3 = arith.constant 3 : index
    %c0_25 = arith.constant 0 : index
    %44 = vector.load %arg4[%c3, %c0_25] : memref<8x256xf32, #tpu.memory_space<vmem>>, vector<1x128xf32>
    %45 = vector.broadcast %44 : vector<1x128xf32> to vector<256x128xf32>
    %46 = arith.addf %43, %45 : vector<256x128xf32>
    %c0_26 = arith.constant 0 : index
    %c0_27 = arith.constant 0 : index
    %47 = vector.load %arg5[%c0_26, %c0_27] : memref<256x128xf32, #tpu.memory_space<vmem>>, vector<256x128xf32>
    tpu.vector_store %arg5[%c0_26, %c0_27], %46 {strides = array<i32>} : memref<256x128xf32, #tpu.memory_space<vmem>>, vector<256x128xf32>,
    return
  }
  func.func @transform_0(%arg0: i32) -> (i32, i32) {
    %c0_i32 = arith.constant 0 : i32
    %c0_i32_0 = arith.constant 0 : i32
    return %arg0, %c0_i32 : i32, i32
  }
  func.func @transform_1(%arg0: i32) -> (i32, i32) {
    %c0_i32 = arith.constant 0 : i32
    %c0_i32_0 = arith.constant 0 : i32
    %c0_i32_1 = arith.constant 0 : i32
    return %c0_i32, %c0_i32_0 : i32, i32
  }
  func.func @transform_2(%arg0: i32) -> (i32, i32, i32) {
    %c0_i32 = arith.constant 0 : i32
    %c0_i32_0 = arith.constant 0 : i32
    %c0_i32_1 = arith.constant 0 : i32
    %c0_i32_2 = arith.constant 0 : i32
    return %c0_i32, %c0_i32_0, %c0_i32_1 : i32, i32, i32
  }
  func.func @transform_3(%arg0: i32) -> (i32, i32) {
    %c0_i32 = arith.constant 0 : i32
    %c0_i32_0 = arith.constant 0 : i32
    %c0_i32_1 = arith.constant 0 : i32
    return %c0_i32, %c0_i32_0 : i32, i32
  }
  func.func @transform_4(%arg0: i32) -> (i32, i32) {
    %c0_i32 = arith.constant 0 : i32
    %c0_i32_0 = arith.constant 0 : i32
    return %arg0, %c0_i32 : i32, i32
  }
}

</mosaic_0001>

<llo_original>
// kernel: _forward_impl.1
$region0: #{_forward_impl.1}
  #allocation0 [shape = 'u32[]', space=smem, size = 0x4, offset = 0x4, fixed_abs, tag = 'smem constant byte address 0x4 - core index']
  #allocation1 [shape = 'u32[144,128]{1,0:T(1,128)}', space=vmem, size = 0x12000, scoped, tag = 'internal scratch']
  %s0 = inlined_call_operand.vmem [shape: f32[256,128], index: 0, kind: input, shape index: {}]
  %s1 = inlined_call_operand.vmem [shape: f32[128,256], index: 1, kind: input, shape index: {}]
  %s2 = inlined_call_operand.vmem [shape: f32[3,128,128], index: 2, kind: input, shape index: {}]
  %s3 = inlined_call_operand.vmem [shape: f32[8,256], index: 3, kind: input, shape index: {}]
  %s4 = inlined_call_operand.vmem [shape: f32[256,128], index: 4, kind: output, shape index: {}]
  %s5 = sld [smem:[#allocation0]]
  $region26: #{_forward_impl.1} parent=0
    _
  %s7 = ssub.s32 1, %s5
  %s8 = scalar_select 0, %s7, %s5
  // Predicated region
  $region2: #{_forward_impl.1} parent=0 // pred_check
    _
  $region3: #{_forward_impl.1} parent=0 // pred_check_branch
    %10 = sbr.rel (0) target = $region5
  $region4: #{_forward_impl.1} parent=0 // pred_region
    _
  $region5: #{_forward_impl.1} parent=0 // pred_fallthru
    _
  // Predicated region
  $region6: #{_forward_impl.1} parent=0 // pred_check
    _
  $region7: #{_forward_impl.1} parent=0 // pred_check_branch
    %12 = sbr.rel (0) target = $region9
  $region8: #{_forward_impl.1} parent=0 // pred_region
    _
  $region9: #{_forward_impl.1} parent=0 // pred_fallthru
    _
  // Predicated region
  $region10: #{_forward_impl.1} parent=0 // pred_check
    _
  $region11: #{_forward_impl.1} parent=0 // pred_check_branch
    %14 = sbr.rel (0) target = $region13
  $region12: #{_forward_impl.1} parent=0 // pred_region
    _
  $region13: #{_forward_impl.1} parent=0 // pred_fallthru
    _
  // Predicated region
  $region14: #{_forward_impl.1} parent=0 // pred_check
    _
  $region15: #{_forward_impl.1} parent=0 // pred_check_branch
    %16 = sbr.rel (0) target = $region17
  $region16: #{_forward_impl.1} parent=0 // pred_region
    _
  $region17: #{_forward_impl.1} parent=0 // pred_fallthru
    _
  %v17 = vld [vmem:[%s0] sm:$0xff]
  %v18 = vld [vmem:[%s0 + $0x8] sm:$0xff]
  %v19 = vld [vmem:[%s0 + $0x10] sm:$0xff]
  %v20 = vld [vmem:[%s0 + $0x18] sm:$0xff]
  %v21 = vld [vmem:[%s0 + $0x20] sm:$0xff]
  %v22 = vld [vmem:[%s0 + $0x28] sm:$0xff]
  %v23 = vld [vmem:[%s0 + $0x30] sm:$0xff]
  %v24 = vld [vmem:[%s0 + $0x38] sm:$0xff]
  %v25 = vld [vmem:[%s0 + $0x40] sm:$0xff]
  %v26 = vld [vmem:[%s0 + $0x48] sm:$0xff]
  %v27 = vld [vmem:[%s0 + $0x50] sm:$0xff]
  %v28 = vld [vmem:[%s0 + $0x58] sm:$0xff]
  %v29 = vld [vmem:[%s0 + $0x60] sm:$0xff]
  %v30 = vld [vmem:[%s0 + $0x68] sm:$0xff]
  %v31 = vld [vmem:[%s0 + $0x70] sm:$0xff]
  %v32 = vld [vmem:[%s0 + $0x78] sm:$0xff]
  %v33 = vld [vmem:[%s0 + $0x80] sm:$0xff]
  %v34 = vld [vmem:[%s0 + $0x88] sm:$0xff]
  %v35 = vld [vmem:[%s0 + $0x90] sm:$0xff]
  %v36 = vld [vmem:[%s0 + $0x98] sm:$0xff]
  %v37 = vld [vmem:[%s0 + $0xa0] sm:$0xff]
  %v38 = vld [vmem:[%s0 + $0xa8] sm:$0xff]
  %v39 = vld [vmem:[%s0 + $0xb0] sm:$0xff]
  %v40 = vld [vmem:[%s0 + $0xb8] sm:$0xff]
  %v41 = vld [vmem:[%s0 + $0xc0] sm:$0xff]
  %v42 = vld [vmem:[%s0 + $0xc8] sm:$0xff]
  %v43 = vld [vmem:[%s0 + $0xd0] sm:$0xff]
  %v44 = vld [vmem:[%s0 + $0xd8] sm:$0xff]
  %v45 = vld [vmem:[%s0 + $0xe0] sm:$0xff]
  %v46 = vld [vmem:[%s0 + $0xe8] sm:$0xff]
  %v47 = vld [vmem:[%s0 + $0xf0] sm:$0xff]
  %v48 = vld [vmem:[%s0 + $0xf8] sm:$0xff]
  %v49 = vld [vmem:[%s2] sm:$0xff]
  %v50 = vld [vmem:[%s2 + $0x8] sm:$0xff]
  %v51 = vld [vmem:[%s2 + $0x10] sm:$0xff]
  %v52 = vld [vmem:[%s2 + $0x18] sm:$0xff]
  %v53 = vld [vmem:[%s2 + $0x20] sm:$0xff]
  %v54 = vld [vmem:[%s2 + $0x28] sm:$0xff]
  %v55 = vld [vmem:[%s2 + $0x30] sm:$0xff]
  %v56 = vld [vmem:[%s2 + $0x38] sm:$0xff]
  %v57 = vld [vmem:[%s2 + $0x40] sm:$0xff]
  %v58 = vld [vmem:[%s2 + $0x48] sm:$0xff]
  %v59 = vld [vmem:[%s2 + $0x50] sm:$0xff]
  %v60 = vld [vmem:[%s2 + $0x58] sm:$0xff]
  %v61 = vld [vmem:[%s2 + $0x60] sm:$0xff]
  %v62 = vld [vmem:[%s2 + $0x68] sm:$0xff]
  %v63 = vld [vmem:[%s2 + $0x70] sm:$0xff]
  %v64 = vld [vmem:[%s2 + $0x78] sm:$0xff]
  %v65 = vld [vmem:[%s3] ss:$0 sm:$0xff]
  %66 = vmatprep.subr.mxu0 0.0
  %67 = vmatpush1.msra.mxu0 %v64
  %68 = vmatprep.subr.mxu0 0.0
  %69 = vmatpush1.msra.mxu0 %v63
  %70 = vmatprep.subr.mxu0 0.0
  %71 = vmatpush1.msra.mxu0 %v62
  %72 = vmatprep.subr.mxu0 0.0
  %73 = vmatpush1.msra.mxu0 %v61
  %74 = vmatprep.subr.mxu0 0.0
  %75 = vmatpush1.msra.mxu0 %v60
  %76 = vmatprep.subr.mxu0 0.0
  %77 = vmatpush1.msra.mxu0 %v59
  %78 = vmatprep.subr.mxu0 0.0
  %79 = vmatpush1.msra.mxu0 %v58
  %80 = vmatprep.subr.mxu0 0.0
  %81 = vmatpush1.msra.mxu0 %v57
  %82 = vmatprep.subr.mxu0 0.0
  %83 = vmatpush1.msra.mxu0 %v56
  %84 = vmatprep.subr.mxu0 0.0
  %85 = vmatpush1.msra.mxu0 %v55
  %86 = vmatprep.subr.mxu0 0.0
  %87 = vmatpush1.msra.mxu0 %v54
  %88 = vmatprep.subr.mxu0 0.0
  %89 = vmatpush1.msra.mxu0 %v53
  %90 = vmatprep.subr.mxu0 0.0
  %91 = vmatpush1.msra.mxu0 %v52
  %92 = vmatprep.subr.mxu0 0.0
  %93 = vmatpush1.msra.mxu0 %v51
  %94 = vmatprep.subr.mxu0 0.0
  %95 = vmatpush1.msra.mxu0 %v50
  %96 = vmatprep.subr.mxu0 0.0
  %97 = vmatpush1.msra.mxu0 %v49
  %98 = vmatprep.subr.mxu0 0.0
  %99 = vmatpush2.msra.mxu0 0.0
  %100 = vmatprep.subr.mxu0 0.0
  %101 = vmatpush2.msra.mxu0 0.0
  %102 = vmatprep.subr.mxu0 0.0
  %103 = vmatpush2.msra.mxu0 0.0
  %104 = vmatprep.subr.mxu0 0.0
  %105 = vmatpush2.msra.mxu0 0.0
  %106 = vmatprep.subr.mxu0 0.0
  %107 = vmatpush2.msra.mxu0 0.0
  %108 = vmatprep.subr.mxu0 0.0
  %109 = vmatpush2.msra.mxu0 0.0
  %110 = vmatprep.subr.mxu0 0.0
  %111 = vmatpush2.msra.mxu0 0.0
  %112 = vmatprep.subr.mxu0 0.0
  %113 = vmatpush2.msra.mxu0 0.0
  %114 = vmatprep.subr.mxu0 0.0
  %115 = vmatpush2.msra.mxu0 0.0
  %116 = vmatprep.subr.mxu0 0.0
  %117 = vmatpush2.msra.mxu0 0.0
  %118 = vmatprep.subr.mxu0 0.0
  %119 = vmatpush2.msra.mxu0 0.0
  %120 = vmatprep.subr.mxu0 0.0
  %121 = vmatpush2.msra.mxu0 0.0
  %122 = vmatprep.subr.mxu0 0.0
  %123 = vmatpush2.msra.mxu0 0.0
  %124 = vmatprep.subr.mxu0 0.0
  %125 = vmatpush2.msra.mxu0 0.0
  %126 = vmatprep.subr.mxu0 0.0
  %127 = vmatpush2.msra.mxu0 0.0
  %128 = vmatprep.subr.mxu0 0.0
  %129 = vmatpush2.msra.mxu0 0.0
  %130 = vmatprep.mubr.f32.mxu0 0.0
  %131 = vmatmul.mubr.f32.gmra.mxu0 %v17
  %v132 = vpop.f32.mrf.mxu0
  %v133 = vadd.f32 %v65, %v132
  %v134 = vpop.f32.mrf.mxu0
  %135 = vmatprep.mubr.f32.mxu0 0.0
  %136 = vmatmul.mubr.f32.gmra.mxu0 %v18
  %v137 = vpop.f32.mrf.mxu0
  %v138 = vadd.f32 %v65, %v137
  %v139 = vpop.f32.mrf.mxu0
  %140 = vmatprep.mubr.f32.mxu0 0.0
  %141 = vmatmul.mubr.f32.gmra.mxu0 %v19
  %v142 = vpop.f32.mrf.mxu0
  %v143 = vadd.f32 %v65, %v142
  %v144 = vpop.f32.mrf.mxu0
  %145 = vmatprep.mubr.f32.mxu0 0.0
  %146 = vmatmul.mubr.f32.gmra.mxu0 %v20
  %v147 = vpop.f32.mrf.mxu0
  %v148 = vadd.f32 %v65, %v147
  %v149 = vpop.f32.mrf.mxu0
  %150 = vmatprep.mubr.f32.mxu0 0.0
  %151 = vmatmul.mubr.f32.gmra.mxu0 %v21
  %v152 = vpop.f32.mrf.mxu0
  %v153 = vadd.f32 %v65, %v152
  %v154 = vpop.f32.mrf.mxu0
  %155 = vmatprep.mubr.f32.mxu0 0.0
  %156 = vmatmul.mubr.f32.gmra.mxu0 %v22
  %v157 = vpop.f32.mrf.mxu0
  %v158 = vadd.f32 %v65, %v157
  %v159 = vpop.f32.mrf.mxu0
  %160 = vmatprep.mubr.f32.mxu0 0.0
  %161 = vmatmul.mubr.f32.gmra.mxu0 %v23
  %v162 = vpop.f32.mrf.mxu0
  %v163 = vadd.f32 %v65, %v162
  %v164 = vpop.f32.mrf.mxu0
  %165 = vmatprep.mubr.f32.mxu0 0.0
  %166 = vmatmul.mubr.f32.gmra.mxu0 %v24
  %v167 = vpop.f32.mrf.mxu0
  %v168 = vadd.f32 %v65, %v167
  %v169 = vpop.f32.mrf.mxu0
  %170 = vmatprep.mubr.f32.mxu0 0.0
  %171 = vmatmul.mubr.f32.gmra.mxu0 %v25
  %v172 = vpop.f32.mrf.mxu0
  %v173 = vadd.f32 %v65, %v172
  %v174 = vpop.f32.mrf.mxu0
  %175 = vmatprep.mubr.f32.mxu0 0.0
  %176 = vmatmul.mubr.f32.gmra.mxu0 %v26
  %v177 = vpop.f32.mrf.mxu0
  %v178 = vadd.f32 %v65, %v177
  %v179 = vpop.f32.mrf.mxu0
  %180 = vmatprep.mubr.f32.mxu0 0.0
  %181 = vmatmul.mubr.f32.gmra.mxu0 %v27
  %v182 = vpop.f32.mrf.mxu0
  %v183 = vadd.f32 %v65, %v182
  %v184 = vpop.f32.mrf.mxu0
  %185 = vmatprep.mubr.f32.mxu0 0.0
  %186 = vmatmul.mubr.f32.gmra.mxu0 %v28
  %v187 = vpop.f32.mrf.mxu0
  %v188 = vadd.f32 %v65, %v187
  %v189 = vpop.f32.mrf.mxu0
  %190 = vmatprep.mubr.f32.mxu0 0.0
  %191 = vmatmul.mubr.f32.gmra.mxu0 %v29
  %v192 = vpop.f32.mrf.mxu0
  %v193 = vadd.f32 %v65, %v192
  %v194 = vpop.f32.mrf.mxu0
  %195 = vmatprep.mubr.f32.mxu0 0.0
  %196 = vmatmul.mubr.f32.gmra.mxu0 %v30
  %v197 = vpop.f32.mrf.mxu0
  %v198 = vadd.f32 %v65, %v197
  %v199 = vpop.f32.mrf.mxu0
  %200 = vmatprep.mubr.f32.mxu0 0.0
  %201 = vmatmul.mubr.f32.gmra.mxu0 %v31
  %v202 = vpop.f32.mrf.mxu0
  %v203 = vadd.f32 %v65, %v202
  %v204 = vpop.f32.mrf.mxu0
  %205 = vmatprep.mubr.f32.mxu0 0.0
  %206 = vmatmul.mubr.f32.gmra.mxu0 %v32
  %v207 = vpop.f32.mrf.mxu0
  %v208 = vadd.f32 %v65, %v207
  %v209 = vpop.f32.mrf.mxu0
  %210 = vmatprep.mubr.f32.mxu0 0.0
  %211 = vmatmul.mubr.f32.gmra.mxu0 %v33
  %v212 = vpop.f32.mrf.mxu0
  %v213 = vadd.f32 %v65, %v212
  %v214 = vpop.f32.mrf.mxu0
  %215 = vmatprep.mubr.f32.mxu0 0.0
  %216 = vmatmul.mubr.f32.gmra.mxu0 %v34
  %v217 = vpop.f32.mrf.mxu0
  %v218 = vadd.f32 %v65, %v217
  %v219 = vpop.f32.mrf.mxu0
  %220 = vmatprep.mubr.f32.mxu0 0.0
  %221 = vmatmul.mubr.f32.gmra.mxu0 %v35
  %v222 = vpop.f32.mrf.mxu0
  %v223 = vadd.f32 %v65, %v222
  %v224 = vpop.f32.mrf.mxu0
  %225 = vmatprep.mubr.f32.mxu0 0.0
  %226 = vmatmul.mubr.f32.gmra.mxu0 %v36
  %v227 = vpop.f32.mrf.mxu0
  %v228 = vadd.f32 %v65, %v227
  %v229 = vpop.f32.mrf.mxu0
  %230 = vmatprep.mubr.f32.mxu0 0.0
  %231 = vmatmul.mubr.f32.gmra.mxu0 %v37
  %v232 = vpop.f32.mrf.mxu0
  %v233 = vadd.f32 %v65, %v232
  %v234 = vpop.f32.mrf.mxu0
  %235 = vmatprep.mubr.f32.mxu0 0.0
  %236 = vmatmul.mubr.f32.gmra.mxu0 %v38
  %v237 = vpop.f32.mrf.mxu0
  %v238 = vadd.f32 %v65, %v237
  %v239 = vpop.f32.mrf.mxu0
  %240 = vmatprep.mubr.f32.mxu0 0.0
  %241 = vmatmul.mubr.f32.gmra.mxu0 %v39
  %v242 = vpop.f32.mrf.mxu0
  %v243 = vadd.f32 %v65, %v242
  %v244 = vpop.f32.mrf.mxu0
  %245 = vmatprep.mubr.f32.mxu0 0.0
  %246 = vmatmul.mubr.f32.gmra.mxu0 %v40
  %v247 = vpop.f32.mrf.mxu0
  %v248 = vadd.f32 %v65, %v247
  %v249 = vpop.f32.mrf.mxu0
  %250 = vmatprep.mubr.f32.mxu0 0.0
  %251 = vmatmul.mubr.f32.gmra.mxu0 %v41
  %v252 = vpop.f32.mrf.mxu0
  %v253 = vadd.f32 %v65, %v252
  %v254 = vpop.f32.mrf.mxu0
  %255 = vmatprep.mubr.f32.mxu0 0.0
  %256 = vmatmul.mubr.f32.gmra.mxu0 %v42
  %v257 = vpop.f32.mrf.mxu0
  %v258 = vadd.f32 %v65, %v257
  %v259 = vpop.f32.mrf.mxu0
  %260 = vmatprep.mubr.f32.mxu0 0.0
  %261 = vmatmul.mubr.f32.gmra.mxu0 %v43
  %v262 = vpop.f32.mrf.mxu0
  %v263 = vadd.f32 %v65, %v262
  %v264 = vpop.f32.mrf.mxu0
  %265 = vmatprep.mubr.f32.mxu0 0.0
  %266 = vmatmul.mubr.f32.gmra.mxu0 %v44
  %v267 = vpop.f32.mrf.mxu0
  %v268 = vadd.f32 %v65, %v267
  %v269 = vpop.f32.mrf.mxu0
  %270 = vmatprep.mubr.f32.mxu0 0.0
  %271 = vmatmul.mubr.f32.gmra.mxu0 %v45
  %v272 = vpop.f32.mrf.mxu0
  %v273 = vadd.f32 %v65, %v272
  %v274 = vpop.f32.mrf.mxu0
  %275 = vmatprep.mubr.f32.mxu0 0.0
  %276 = vmatmul.mubr.f32.gmra.mxu0 %v46
  %v277 = vpop.f32.mrf.mxu0
  %v278 = vadd.f32 %v65, %v277
  %v279 = vpop.f32.mrf.mxu0
  %280 = vmatprep.mubr.f32.mxu0 0.0
  %281 = vmatmul.mubr.f32.gmra.mxu0 %v47
  %v282 = vpop.f32.mrf.mxu0
  %v283 = vadd.f32 %v65, %v282
  %v284 = vpop.f32.mrf.mxu0
  %285 = vmatprep.mubr.f32.mxu0 0.0
  %286 = vmatmul.mubr.f32.gmra.mxu0 %v48
  %v287 = vpop.f32.mrf.mxu0
  %v288 = vadd.f32 %v65, %v287
  %v289 = vpop.f32.mrf.mxu0
  %290 = vdwg.mxu0
  %v291 = vmax.f32 %v133, 0.0
  %v292 = vmax.f32 %v138, 0.0
  %v293 = vmax.f32 %v143, 0.0
  %v294 = vmax.f32 %v148, 0.0
  %v295 = vmax.f32 %v153, 0.0
  %v296 = vmax.f32 %v158, 0.0
  %v297 = vmax.f32 %v163, 0.0
  %v298 = vmax.f32 %v168, 0.0
  %v299 = vmax.f32 %v173, 0.0
  %v300 = vmax.f32 %v178, 0.0
  %v301 = vmax.f32 %v183, 0.0
  %v302 = vmax.f32 %v188, 0.0
  %v303 = vmax.f32 %v193, 0.0
  %v304 = vmax.f32 %v198, 0.0
  %v305 = vmax.f32 %v203, 0.0
  %v306 = vmax.f32 %v208, 0.0
  %v307 = vmax.f32 %v213, 0.0
  %v308 = vmax.f32 %v218, 0.0
  %v309 = vmax.f32 %v223, 0.0
  %v310 = vmax.f32 %v228, 0.0
  %v311 = vmax.f32 %v233, 0.0
  %v312 = vmax.f32 %v238, 0.0
  %v313 = vmax.f32 %v243, 0.0
  %v314 = vmax.f32 %v248, 0.0
  %v315 = vmax.f32 %v253, 0.0
  %v316 = vmax.f32 %v258, 0.0
  %v317 = vmax.f32 %v263, 0.0
  %v318 = vmax.f32 %v268, 0.0
  %v319 = vmax.f32 %v273, 0.0
  %v320 = vmax.f32 %v278, 0.0
  %v321 = vmax.f32 %v283, 0.0
  %v322 = vmax.f32 %v288, 0.0
  %v323 = vld [vmem:[%s1] sm:$0xff]
  %v324 = vld [vmem:[%s1 + $0x8] sm:$0xff]
  %v325 = vld [vmem:[%s1 + $0x10] sm:$0xff]
  %v326 = vld [vmem:[%s1 + $0x18] sm:$0xff]
  %v327 = vld [vmem:[%s1 + $0x20] sm:$0xff]
  %v328 = vld [vmem:[%s1 + $0x28] sm:$0xff]
  %v329 = vld [vmem:[%s1 + $0x30] sm:$0xff]
  %v330 = vld [vmem:[%s1 + $0x38] sm:$0xff]
  %v331 = vld [vmem:[%s1 + $0x40] sm:$0xff]
  %v332 = vld [vmem:[%s1 + $0x48] sm:$0xff]
  %v333 = vld [vmem:[%s1 + $0x50] sm:$0xff]
  %v334 = vld [vmem:[%s1 + $0x58] sm:$0xff]
  %v335 = vld [vmem:[%s1 + $0x60] sm:$0xff]
  %v336 = vld [vmem:[%s1 + $0x68] sm:$0xff]
  %v337 = vld [vmem:[%s1 + $0x70] sm:$0xff]
  %v338 = vld [vmem:[%s1 + $0x78] sm:$0xff]
  %v339 = vld [vmem:[%s1 + $0x80] sm:$0xff]
  %v340 = vld [vmem:[%s1 + $0x88] sm:$0xff]
  %v341 = vld [vmem:[%s1 + $0x90] sm:$0xff]
  %v342 = vld [vmem:[%s1 + $0x98] sm:$0xff]
  %v343 = vld [vmem:[%s1 + $0xa0] sm:$0xff]
  %v344 = vld [vmem:[%s1 + $0xa8] sm:$0xff]
  %v345 = vld [vmem:[%s1 + $0xb0] sm:$0xff]
  %v346 = vld [vmem:[%s1 + $0xb8] sm:$0xff]
  %v347 = vld [vmem:[%s1 + $0xc0] sm:$0xff]
  %v348 = vld [vmem:[%s1 + $0xc8] sm:$0xff]
  %v349 = vld [vmem:[%s1 + $0xd0] sm:$0xff]
  %v350 = vld [vmem:[%s1 + $0xd8] sm:$0xff]
  %v351 = vld [vmem:[%s1 + $0xe0] sm:$0xff]
  %v352 = vld [vmem:[%s1 + $0xe8] sm:$0xff]
  %v353 = vld [vmem:[%s1 + $0xf0] sm:$0xff]
  %v354 = vld [vmem:[%s1 + $0xf8] sm:$0xff]
  %s355 = scalar_lea.vmem %s3, 1
  %v356 = vld [vmem:[%s355] ss:$8 sm:$0x3]
  %v358 = vlaneseq
  %v359 = vshrl.u32 %v358, 7
  %v360 = vsub.s32 0, %v359
  %v361 = vrot.slane %v356, %v360
  %v362 = vlaneseq
  %v363 = vshrl.u32 %v362, 7
  %v364 = vsub.s32 1, %v363
  %v365 = vrot.slane %v356, %v364
  %368 = vmatprep.subr.mxu0 %v354
  %369 = vmatpush1.msra.mxu0 %v353
  %370 = vmatprep.subr.mxu0 %v352
  %371 = vmatpush1.msra.mxu0 %v351
  %372 = vmatprep.subr.mxu0 %v350
  %373 = vmatpush1.msra.mxu0 %v349
  %374 = vmatprep.subr.mxu0 %v348
  %375 = vmatpush1.msra.mxu0 %v347
  %376 = vmatprep.subr.mxu0 %v346
  %377 = vmatpush1.msra.mxu0 %v345
  %378 = vmatprep.subr.mxu0 %v344
  %379 = vmatpush1.msra.mxu0 %v343
  %380 = vmatprep.subr.mxu0 %v342
  %381 = vmatpush1.msra.mxu0 %v341
  %382 = vmatprep.subr.mxu0 %v340
  %383 = vmatpush1.msra.mxu0 %v339
  %384 = vmatprep.subr.mxu0 %v338
  %385 = vmatpush1.msra.mxu0 %v337
  %386 = vmatprep.subr.mxu0 %v336
  %387 = vmatpush1.msra.mxu0 %v335
  %388 = vmatprep.subr.mxu0 %v334
  %389 = vmatpush1.msra.mxu0 %v333
  %390 = vmatprep.subr.mxu0 %v332
  %391 = vmatpush1.msra.mxu0 %v331
  %392 = vmatprep.subr.mxu0 %v330
  %393 = vmatpush1.msra.mxu0 %v329
  %394 = vmatprep.subr.mxu0 %v328
  %395 = vmatpush1.msra.mxu0 %v327
  %396 = vmatprep.subr.mxu0 %v326
  %397 = vmatpush1.msra.mxu0 %v325
  %398 = vmatprep.subr.mxu0 %v324
  %399 = vmatpush1.msra.mxu0 %v323
  %400 = vmatprep.subr.mxu0 0.0
  %401 = vmatpush2.msra.mxu0 0.0
  %402 = vmatprep.subr.mxu0 0.0
  %403 = vmatpush2.msra.mxu0 0.0
  %404 = vmatprep.subr.mxu0 0.0
  %405 = vmatpush2.msra.mxu0 0.0
  %406 = vmatprep.subr.mxu0 0.0
  %407 = vmatpush2.msra.mxu0 0.0
  %408 = vmatprep.subr.mxu0 0.0
  %409 = vmatpush2.msra.mxu0 0.0
  %410 = vmatprep.subr.mxu0 0.0
  %411 = vmatpush2.msra.mxu0 0.0
  %412 = vmatprep.subr.mxu0 0.0
  %413 = vmatpush2.msra.mxu0 0.0
  %414 = vmatprep.subr.mxu0 0.0
  %415 = vmatpush2.msra.mxu0 0.0
  %416 = vmatprep.subr.mxu0 0.0
  %417 = vmatpush2.msra.mxu0 0.0
  %418 = vmatprep.subr.mxu0 0.0
  %419 = vmatpush2.msra.mxu0 0.0
  %420 = vmatprep.subr.mxu0 0.0
  %421 = vmatpush2.msra.mxu0 0.0
  %422 = vmatprep.subr.mxu0 0.0
  %423 = vmatpush2.msra.mxu0 0.0
  %424 = vmatprep.subr.mxu0 0.0
  %425 = vmatpush2.msra.mxu0 0.0
  %426 = vmatprep.subr.mxu0 0.0
  %427 = vmatpush2.msra.mxu0 0.0
  %428 = vmatprep.subr.mxu0 0.0
  %429 = vmatpush2.msra.mxu0 0.0
  %430 = vmatprep.subr.mxu0 0.0
  %431 = vmatpush2.msra.mxu0 0.0
  %432 = vmatprep.mubr.f32.mxu0 0.0
  %433 = vmatmul.mubr.f32.gmra.mxu0 %v291
  %v434 = vpop.f32.mrf.mxu0
  %v435 = vadd.f32 %v361, %v434
  %v436 = vpop.f32.mrf.mxu0
  %v437 = vadd.f32 %v365, %v436
  %438 = vmatprep.mubr.f32.mxu0 0.0
  %439 = vmatmul.mubr.f32.gmra.mxu0 %v292
  %v440 = vpop.f32.mrf.mxu0
  %v441 = vadd.f32 %v361, %v440
  %v442 = vpop.f32.mrf.mxu0
  %v443 = vadd.f32 %v365, %v442
  %444 = vmatprep.mubr.f32.mxu0 0.0
  %445 = vmatmul.mubr.f32.gmra.mxu0 %v293
  %v446 = vpop.f32.mrf.mxu0
  %v447 = vadd.f32 %v361, %v446
  %v448 = vpop.f32.mrf.mxu0
  %v449 = vadd.f32 %v365, %v448
  %450 = vmatprep.mubr.f32.mxu0 0.0
  %451 = vmatmul.mubr.f32.gmra.mxu0 %v294
  %v452 = vpop.f32.mrf.mxu0
  %v453 = vadd.f32 %v361, %v452
  %v454 = vpop.f32.mrf.mxu0
  %v455 = vadd.f32 %v365, %v454
  %456 = vmatprep.mubr.f32.mxu0 0.0
  %457 = vmatmul.mubr.f32.gmra.mxu0 %v295
  %v458 = vpop.f32.mrf.mxu0
  %v459 = vadd.f32 %v361, %v458
  %v460 = vpop.f32.mrf.mxu0
  %v461 = vadd.f32 %v365, %v460
  %462 = vmatprep.mubr.f32.mxu0 0.0
  %463 = vmatmul.mubr.f32.gmra.mxu0 %v296
  %v464 = vpop.f32.mrf.mxu0
  %v465 = vadd.f32 %v361, %v464
  %v466 = vpop.f32.mrf.mxu0
  %v467 = vadd.f32 %v365, %v466
  %468 = vmatprep.mubr.f32.mxu0 0.0
  %469 = vmatmul.mubr.f32.gmra.mxu0 %v297
  %v470 = vpop.f32.mrf.mxu0
  %v471 = vadd.f32 %v361, %v470
  %v472 = vpop.f32.mrf.mxu0
  %v473 = vadd.f32 %v365, %v472
  %474 = vmatprep.mubr.f32.mxu0 0.0
  %475 = vmatmul.mubr.f32.gmra.mxu0 %v298
  %v476 = vpop.f32.mrf.mxu0
  %v477 = vadd.f32 %v361, %v476
  %v478 = vpop.f32.mrf.mxu0
  %v479 = vadd.f32 %v365, %v478
  %480 = vmatprep.mubr.f32.mxu0 0.0
  %481 = vmatmul.mubr.f32.gmra.mxu0 %v299
  %v482 = vpop.f32.mrf.mxu0
  %v483 = vadd.f32 %v361, %v482
  %v484 = vpop.f32.mrf.mxu0
  %v485 = vadd.f32 %v365, %v484
  %486 = vmatprep.mubr.f32.mxu0 0.0
  %487 = vmatmul.mubr.f32.gmra.mxu0 %v300
  %v488 = vpop.f32.mrf.mxu0
  %v489 = vadd.f32 %v361, %v488
  %v490 = vpop.f32.mrf.mxu0
  %v491 = vadd.f32 %v365, %v490
  %492 = vmatprep.mubr.f32.mxu0 0.0
  %493 = vmatmul.mubr.f32.gmra.mxu0 %v301
  %v494 = vpop.f32.mrf.mxu0
  %v495 = vadd.f32 %v361, %v494
  %v496 = vpop.f32.mrf.mxu0
  %v497 = vadd.f32 %v365, %v496
  %498 = vmatprep.mubr.f32.mxu0 0.0
  %499 = vmatmul.mubr.f32.gmra.mxu0 %v302
  %v500 = vpop.f32.mrf.mxu0
  %v501 = vadd.f32 %v361, %v500
  %v502 = vpop.f32.mrf.mxu0
  %v503 = vadd.f32 %v365, %v502
  %504 = vmatprep.mubr.f32.mxu0 0.0
  %505 = vmatmul.mubr.f32.gmra.mxu0 %v303
  %v506 = vpop.f32.mrf.mxu0
  %v507 = vadd.f32 %v361, %v506
  %v508 = vpop.f32.mrf.mxu0
  %v509 = vadd.f32 %v365, %v508
  %510 = vmatprep.mubr.f32.mxu0 0.0
  %511 = vmatmul.mubr.f32.gmra.mxu0 %v304
  %v512 = vpop.f32.mrf.mxu0
  %v513 = vadd.f32 %v361, %v512
  %v514 = vpop.f32.mrf.mxu0
  %v515 = vadd.f32 %v365, %v514
  %516 = vmatprep.mubr.f32.mxu0 0.0
  %517 = vmatmul.mubr.f32.gmra.mxu0 %v305
  %v518 = vpop.f32.mrf.mxu0
  %v519 = vadd.f32 %v361, %v518
  %v520 = vpop.f32.mrf.mxu0
  %v521 = vadd.f32 %v365, %v520
  %522 = vmatprep.mubr.f32.mxu0 0.0
  %523 = vmatmul.mubr.f32.gmra.mxu0 %v306
  %v524 = vpop.f32.mrf.mxu0
  %v525 = vadd.f32 %v361, %v524
  %v526 = vpop.f32.mrf.mxu0
  %v527 = vadd.f32 %v365, %v526
  %528 = vmatprep.mubr.f32.mxu0 0.0
  %529 = vmatmul.mubr.f32.gmra.mxu0 %v307
  %v530 = vpop.f32.mrf.mxu0
  %v531 = vadd.f32 %v361, %v530
  %v532 = vpop.f32.mrf.mxu0
  %v533 = vadd.f32 %v365, %v532
  %534 = vmatprep.mubr.f32.mxu0 0.0
  %535 = vmatmul.mubr.f32.gmra.mxu0 %v308
  %v536 = vpop.f32.mrf.mxu0
  %v537 = vadd.f32 %v361, %v536
  %v538 = vpop.f32.mrf.mxu0
  %v539 = vadd.f32 %v365, %v538
  %540 = vmatprep.mubr.f32.mxu0 0.0
  %541 = vmatmul.mubr.f32.gmra.mxu0 %v309
  %v542 = vpop.f32.mrf.mxu0
  %v543 = vadd.f32 %v361, %v542
  %v544 = vpop.f32.mrf.mxu0
  %v545 = vadd.f32 %v365, %v544
  %546 = vmatprep.mubr.f32.mxu0 0.0
  %547 = vmatmul.mubr.f32.gmra.mxu0 %v310
  %v548 = vpop.f32.mrf.mxu0
  %v549 = vadd.f32 %v361, %v548
  %v550 = vpop.f32.mrf.mxu0
  %v551 = vadd.f32 %v365, %v550
  %552 = vmatprep.mubr.f32.mxu0 0.0
  %553 = vmatmul.mubr.f32.gmra.mxu0 %v311
  %v554 = vpop.f32.mrf.mxu0
  %v555 = vadd.f32 %v361, %v554
  %v556 = vpop.f32.mrf.mxu0
  %v557 = vadd.f32 %v365, %v556
  %558 = vmatprep.mubr.f32.mxu0 0.0
  %559 = vmatmul.mubr.f32.gmra.mxu0 %v312
  %v560 = vpop.f32.mrf.mxu0
  %v561 = vadd.f32 %v361, %v560
  %v562 = vpop.f32.mrf.mxu0
  %v563 = vadd.f32 %v365, %v562
  %564 = vmatprep.mubr.f32.mxu0 0.0
  %565 = vmatmul.mubr.f32.gmra.mxu0 %v313
  %v566 = vpop.f32.mrf.mxu0
  %v567 = vadd.f32 %v361, %v566
  %v568 = vpop.f32.mrf.mxu0
  %v569 = vadd.f32 %v365, %v568
  %570 = vmatprep.mubr.f32.mxu0 0.0
  %571 = vmatmul.mubr.f32.gmra.mxu0 %v314
  %v572 = vpop.f32.mrf.mxu0
  %v573 = vadd.f32 %v361, %v572
  %v574 = vpop.f32.mrf.mxu0
  %v575 = vadd.f32 %v365, %v574
  %576 = vmatprep.mubr.f32.mxu0 0.0
  %577 = vmatmul.mubr.f32.gmra.mxu0 %v315
  %v578 = vpop.f32.mrf.mxu0
  %v579 = vadd.f32 %v361, %v578
  %v580 = vpop.f32.mrf.mxu0
  %v581 = vadd.f32 %v365, %v580
  %582 = vmatprep.mubr.f32.mxu0 0.0
  %583 = vmatmul.mubr.f32.gmra.mxu0 %v316
  %v584 = vpop.f32.mrf.mxu0
  %v585 = vadd.f32 %v361, %v584
  %v586 = vpop.f32.mrf.mxu0
  %v587 = vadd.f32 %v365, %v586
  %588 = vmatprep.mubr.f32.mxu0 0.0
  %589 = vmatmul.mubr.f32.gmra.mxu0 %v317
  %v590 = vpop.f32.mrf.mxu0
  %v591 = vadd.f32 %v361, %v590
  %v592 = vpop.f32.mrf.mxu0
  %v593 = vadd.f32 %v365, %v592
  %594 = vmatprep.mubr.f32.mxu0 0.0
  %595 = vmatmul.mubr.f32.gmra.mxu0 %v318
  %v596 = vpop.f32.mrf.mxu0
  %v597 = vadd.f32 %v361, %v596
  %v598 = vpop.f32.mrf.mxu0
  %v599 = vadd.f32 %v365, %v598
  %600 = vmatprep.mubr.f32.mxu0 0.0
  %601 = vmatmul.mubr.f32.gmra.mxu0 %v319
  %v602 = vpop.f32.mrf.mxu0
  %v603 = vadd.f32 %v361, %v602
  %v604 = vpop.f32.mrf.mxu0
  %v605 = vadd.f32 %v365, %v604
  %606 = vmatprep.mubr.f32.mxu0 0.0
  %607 = vmatmul.mubr.f32.gmra.mxu0 %v320
  %v608 = vpop.f32.mrf.mxu0
  %v609 = vadd.f32 %v361, %v608
  %v610 = vpop.f32.mrf.mxu0
  %v611 = vadd.f32 %v365, %v610
  %612 = vmatprep.mubr.f32.mxu0 0.0
  %613 = vmatmul.mubr.f32.gmra.mxu0 %v321
  %v614 = vpop.f32.mrf.mxu0
  %v615 = vadd.f32 %v361, %v614
  %v616 = vpop.f32.mrf.mxu0
  %v617 = vadd.f32 %v365, %v616
  %618 = vmatprep.mubr.f32.mxu0 0.0
  %619 = vmatmul.mubr.f32.gmra.mxu0 %v322
  %v620 = vpop.f32.mrf.mxu0
  %v621 = vadd.f32 %v361, %v620
  %v622 = vpop.f32.mrf.mxu0
  %v623 = vadd.f32 %v365, %v622
  %624 = vdwg.mxu0
  %v625 = vmax.f32 %v437, 0.0
  %v626 = vmax.f32 %v443, 0.0
  %v627 = vmax.f32 %v449, 0.0
  %v628 = vmax.f32 %v455, 0.0
  %v629 = vmax.f32 %v461, 0.0
  %v630 = vmax.f32 %v467, 0.0
  %v631 = vmax.f32 %v473, 0.0
  %v632 = vmax.f32 %v479, 0.0
  %v633 = vmax.f32 %v485, 0.0
  %v634 = vmax.f32 %v491, 0.0
  %v635 = vmax.f32 %v497, 0.0
  %v636 = vmax.f32 %v503, 0.0
  %v637 = vmax.f32 %v509, 0.0
  %v638 = vmax.f32 %v515, 0.0
  %v639 = vmax.f32 %v521, 0.0
  %v640 = vmax.f32 %v527, 0.0
  %v641 = vmax.f32 %v533, 0.0
  %v642 = vmax.f32 %v539, 0.0
  %v643 = vmax.f32 %v545, 0.0
  %v644 = vmax.f32 %v551, 0.0
  %v645 = vmax.f32 %v557, 0.0
  %v646 = vmax.f32 %v563, 0.0
  %v647 = vmax.f32 %v569, 0.0
  %v648 = vmax.f32 %v575, 0.0
  %v649 = vmax.f32 %v581, 0.0
  %v650 = vmax.f32 %v587, 0.0
  %v651 = vmax.f32 %v593, 0.0
  %v652 = vmax.f32 %v599, 0.0
  %v653 = vmax.f32 %v605, 0.0
  %v654 = vmax.f32 %v611, 0.0
  %v655 = vmax.f32 %v617, 0.0
  %v656 = vmax.f32 %v623, 0.0
  %v657 = vld [vmem:[%s3 + $0x2] ss:$0 sm:$0xff]
  %v658 = vmul.f32 %v625, %v657
  %v659 = vmul.f32 %v626, %v657
  %v660 = vmul.f32 %v627, %v657
  %v661 = vmul.f32 %v628, %v657
  %v662 = vmul.f32 %v629, %v657
  %v663 = vmul.f32 %v630, %v657
  %v664 = vmul.f32 %v631, %v657
  %v665 = vmul.f32 %v632, %v657
  %v666 = vmul.f32 %v633, %v657
  %v667 = vmul.f32 %v634, %v657
  %v668 = vmul.f32 %v635, %v657
  %v669 = vmul.f32 %v636, %v657
  %v670 = vmul.f32 %v637, %v657
  %v671 = vmul.f32 %v638, %v657
  %v672 = vmul.f32 %v639, %v657
  %v673 = vmul.f32 %v640, %v657
  %v674 = vmul.f32 %v641, %v657
  %v675 = vmul.f32 %v642, %v657
  %v676 = vmul.f32 %v643, %v657
  %v677 = vmul.f32 %v644, %v657
  %v678 = vmul.f32 %v645, %v657
  %v679 = vmul.f32 %v646, %v657
  %v680 = vmul.f32 %v647, %v657
  %v681 = vmul.f32 %v648, %v657
  %v682 = vmul.f32 %v649, %v657
  %v683 = vmul.f32 %v650, %v657
  %v684 = vmul.f32 %v651, %v657
  %v685 = vmul.f32 %v652, %v657
  %v686 = vmul.f32 %v653, %v657
  %v687 = vmul.f32 %v654, %v657
  %v688 = vmul.f32 %v655, %v657
  %v689 = vmul.f32 %v656, %v657
  %690 = vadd.xlane.f32.xlu0 %v658
  %v691 = vpop.xlane.xlu0 %690
  %692 = vadd.xlane.f32.xlu0 %v659
  %v693 = vpop.xlane.xlu0 %692
  %694 = vadd.xlane.f32.xlu0 %v660
  %v695 = vpop.xlane.xlu0 %694
  %696 = vadd.xlane.f32.xlu0 %v661
  %v697 = vpop.xlane.xlu0 %696
  %698 = vadd.xlane.f32.xlu0 %v662
  %v699 = vpop.xlane.xlu0 %698
  %700 = vadd.xlane.f32.xlu0 %v663
  %v701 = vpop.xlane.xlu0 %700
  %702 = vadd.xlane.f32.xlu0 %v664
  %v703 = vpop.xlane.xlu0 %702
  %704 = vadd.xlane.f32.xlu0 %v665
  %v705 = vpop.xlane.xlu0 %704
  %706 = vadd.xlane.f32.xlu0 %v666
  %v707 = vpop.xlane.xlu0 %706
  %708 = vadd.xlane.f32.xlu0 %v667
  %v709 = vpop.xlane.xlu0 %708
  %710 = vadd.xlane.f32.xlu0 %v668
  %v711 = vpop.xlane.xlu0 %710
  %712 = vadd.xlane.f32.xlu0 %v669
  %v713 = vpop.xlane.xlu0 %712
  %714 = vadd.xlane.f32.xlu0 %v670
  %v715 = vpop.xlane.xlu0 %714
  %716 = vadd.xlane.f32.xlu0 %v671
  %v717 = vpop.xlane.xlu0 %716
  %718 = vadd.xlane.f32.xlu0 %v672
  %v719 = vpop.xlane.xlu0 %718
  %720 = vadd.xlane.f32.xlu0 %v673
  %v721 = vpop.xlane.xlu0 %720
  %722 = vadd.xlane.f32.xlu0 %v674
  %v723 = vpop.xlane.xlu0 %722
  %724 = vadd.xlane.f32.xlu0 %v675
  %v725 = vpop.xlane.xlu0 %724
  %726 = vadd.xlane.f32.xlu0 %v676
  %v727 = vpop.xlane.xlu0 %726
  %728 = vadd.xlane.f32.xlu0 %v677
  %v729 = vpop.xlane.xlu0 %728
  %730 = vadd.xlane.f32.xlu0 %v678
  %v731 = vpop.xlane.xlu0 %730
  %732 = vadd.xlane.f32.xlu0 %v679
  %v733 = vpop.xlane.xlu0 %732
  %734 = vadd.xlane.f32.xlu0 %v680
  %v735 = vpop.xlane.xlu0 %734
  %736 = vadd.xlane.f32.xlu0 %v681
  %v737 = vpop.xlane.xlu0 %736
  %738 = vadd.xlane.f32.xlu0 %v682
  %v739 = vpop.xlane.xlu0 %738
  %740 = vadd.xlane.f32.xlu0 %v683
  %v741 = vpop.xlane.xlu0 %740
  %742 = vadd.xlane.f32.xlu0 %v684
  %v743 = vpop.xlane.xlu0 %742
  %744 = vadd.xlane.f32.xlu0 %v685
  %v745 = vpop.xlane.xlu0 %744
  %746 = vadd.xlane.f32.xlu0 %v686
  %v747 = vpop.xlane.xlu0 %746
  %748 = vadd.xlane.f32.xlu0 %v687
  %v749 = vpop.xlane.xlu0 %748
  %750 = vadd.xlane.f32.xlu0 %v688
  %v751 = vpop.xlane.xlu0 %750
  %752 = vadd.xlane.f32.xlu0 %v689
  %v753 = vpop.xlane.xlu0 %752
  %v754 = vld [vmem:[%s3 + $0x4] ss:$0 sm:$0xff]
  %v755 = vadd.f32 %v691, %v754
  %v756 = vadd.f32 %v693, %v754
  %v757 = vadd.f32 %v695, %v754
  %v758 = vadd.f32 %v697, %v754
  %v759 = vadd.f32 %v699, %v754
  %v760 = vadd.f32 %v701, %v754
  %v761 = vadd.f32 %v703, %v754
  %v762 = vadd.f32 %v705, %v754
  %v763 = vadd.f32 %v707, %v754
  %v764 = vadd.f32 %v709, %v754
  %v765 = vadd.f32 %v711, %v754
  %v766 = vadd.f32 %v713, %v754
  %v767 = vadd.f32 %v715, %v754
  %v768 = vadd.f32 %v717, %v754
  %v769 = vadd.f32 %v719, %v754
  %v770 = vadd.f32 %v721, %v754
  %v771 = vadd.f32 %v723, %v754
  %v772 = vadd.f32 %v725, %v754
  %v773 = vadd.f32 %v727, %v754
  %v774 = vadd.f32 %v729, %v754
  %v775 = vadd.f32 %v731, %v754
  %v776 = vadd.f32 %v733, %v754
  %v777 = vadd.f32 %v735, %v754
  %v778 = vadd.f32 %v737, %v754
  %v779 = vadd.f32 %v739, %v754
  %v780 = vadd.f32 %v741, %v754
  %v781 = vadd.f32 %v743, %v754
  %v782 = vadd.f32 %v745, %v754
  %v783 = vadd.f32 %v747, %v754
  %v784 = vadd.f32 %v749, %v754
  %v785 = vadd.f32 %v751, %v754
  %v786 = vadd.f32 %v753, %v754
  %v787 = vxor.u32 %v755, 2147483648
  %v788 = vxor.u32 %v756, 2147483648
  %v789 = vxor.u32 %v757, 2147483648
  %v790 = vxor.u32 %v758, 2147483648
  %v791 = vxor.u32 %v759, 2147483648
  %v792 = vxor.u32 %v760, 2147483648
  %v793 = vxor.u32 %v761, 2147483648
  %v794 = vxor.u32 %v762, 2147483648
  %v795 = vxor.u32 %v763, 2147483648
  %v796 = vxor.u32 %v764, 2147483648
  %v797 = vxor.u32 %v765, 2147483648
  %v798 = vxor.u32 %v766, 2147483648
  %v799 = vxor.u32 %v767, 2147483648
  %v800 = vxor.u32 %v768, 2147483648
  %v801 = vxor.u32 %v769, 2147483648
  %v802 = vxor.u32 %v770, 2147483648
  %v803 = vxor.u32 %v771, 2147483648
  %v804 = vxor.u32 %v772, 2147483648
  %v805 = vxor.u32 %v773, 2147483648
  %v806 = vxor.u32 %v774, 2147483648
  %v807 = vxor.u32 %v775, 2147483648
  %v808 = vxor.u32 %v776, 2147483648
  %v809 = vxor.u32 %v777, 2147483648
  %v810 = vxor.u32 %v778, 2147483648
  %v811 = vxor.u32 %v779, 2147483648
  %v812 = vxor.u32 %v780, 2147483648
  %v813 = vxor.u32 %v781, 2147483648
  %v814 = vxor.u32 %v782, 2147483648
  %v815 = vxor.u32 %v783, 2147483648
  %v816 = vxor.u32 %v784, 2147483648
  %v817 = vxor.u32 %v785, 2147483648
  %v818 = vxor.u32 %v786, 2147483648
  %v819 = vmul.f32 %v787, 1.442695
  %v820 = vpow.pop %v819
  %v821 = vmul.f32 %v788, 1.442695
  %v822 = vpow.pop %v821
  %v823 = vmul.f32 %v789, 1.442695
  %v824 = vpow.pop %v823
  %v825 = vmul.f32 %v790, 1.442695
  %v826 = vpow.pop %v825
  %v827 = vmul.f32 %v791, 1.442695
  %v828 = vpow.pop %v827
  %v829 = vmul.f32 %v792, 1.442695
  %v830 = vpow.pop %v829
  %v831 = vmul.f32 %v793, 1.442695
  %v832 = vpow.pop %v831
  %v833 = vmul.f32 %v794, 1.442695
  %v834 = vpow.pop %v833
  %v835 = vmul.f32 %v795, 1.442695
  %v836 = vpow.pop %v835
  %v837 = vmul.f32 %v796, 1.442695
  %v838 = vpow.pop %v837
  %v839 = vmul.f32 %v797, 1.442695
  %v840 = vpow.pop %v839
  %v841 = vmul.f32 %v798, 1.442695
  %v842 = vpow.pop %v841
  %v843 = vmul.f32 %v799, 1.442695
  %v844 = vpow.pop %v843
  %v845 = vmul.f32 %v800, 1.442695
  %v846 = vpow.pop %v845
  %v847 = vmul.f32 %v801, 1.442695
  %v848 = vpow.pop %v847
  %v849 = vmul.f32 %v802, 1.442695
  %v850 = vpow.pop %v849
  %v851 = vmul.f32 %v803, 1.442695
  %v852 = vpow.pop %v851
  %v853 = vmul.f32 %v804, 1.442695
  %v854 = vpow.pop %v853
  %v855 = vmul.f32 %v805, 1.442695
  %v856 = vpow.pop %v855
  %v857 = vmul.f32 %v806, 1.442695
  %v858 = vpow.pop %v857
  %v859 = vmul.f32 %v807, 1.442695
  %v860 = vpow.pop %v859
  %v861 = vmul.f32 %v808, 1.442695
  %v862 = vpow.pop %v861
  %v863 = vmul.f32 %v809, 1.442695
  %v864 = vpow.pop %v863
  %v865 = vmul.f32 %v810, 1.442695
  %v866 = vpow.pop %v865
  %v867 = vmul.f32 %v811, 1.442695
  %v868 = vpow.pop %v867
  %v869 = vmul.f32 %v812, 1.442695
  %v870 = vpow.pop %v869
  %v871 = vmul.f32 %v813, 1.442695
  %v872 = vpow.pop %v871
  %v873 = vmul.f32 %v814, 1.442695
  %v874 = vpow.pop %v873
  %v875 = vmul.f32 %v815, 1.442695
  %v876 = vpow.pop %v875
  %v877 = vmul.f32 %v816, 1.442695
  %v878 = vpow.pop %v877
  %v879 = vmul.f32 %v817, 1.442695
  %v880 = vpow.pop %v879
  %v881 = vmul.f32 %v818, 1.442695
  %v882 = vpow.pop %v881
  %v883 = vadd.f32 %v820, 1.0
  %v884 = vadd.f32 %v822, 1.0
  %v885 = vadd.f32 %v824, 1.0
  %v886 = vadd.f32 %v826, 1.0
  %v887 = vadd.f32 %v828, 1.0
  %v888 = vadd.f32 %v830, 1.0
  %v889 = vadd.f32 %v832, 1.0
  %v890 = vadd.f32 %v834, 1.0
  %v891 = vadd.f32 %v836, 1.0
  %v892 = vadd.f32 %v838, 1.0
  %v893 = vadd.f32 %v840, 1.0
  %v894 = vadd.f32 %v842, 1.0
  %v895 = vadd.f32 %v844, 1.0
  %v896 = vadd.f32 %v846, 1.0
  %v897 = vadd.f32 %v848, 1.0
  %v898 = vadd.f32 %v850, 1.0
  %v899 = vadd.f32 %v852, 1.0
  %v900 = vadd.f32 %v854, 1.0
  %v901 = vadd.f32 %v856, 1.0
  %v902 = vadd.f32 %v858, 1.0
  %v903 = vadd.f32 %v860, 1.0
  %v904 = vadd.f32 %v862, 1.0
  %v905 = vadd.f32 %v864, 1.0
  %v906 = vadd.f32 %v866, 1.0
  %v907 = vadd.f32 %v868, 1.0
  %v908 = vadd.f32 %v870, 1.0
  %v909 = vadd.f32 %v872, 1.0
  %v910 = vadd.f32 %v874, 1.0
  %v911 = vadd.f32 %v876, 1.0
  %v912 = vadd.f32 %v878, 1.0
  %v913 = vadd.f32 %v880, 1.0
  %v914 = vadd.f32 %v882, 1.0
  %v915 = vrcp.pop %v883
  %v916 = vmul.f32 1.0, %v915
  %v917 = vrcp.pop %v884
  %v918 = vmul.f32 1.0, %v917
  %v919 = vrcp.pop %v885
  %v920 = vmul.f32 1.0, %v919
  %v921 = vrcp.pop %v886
  %v922 = vmul.f32 1.0, %v921
  %v923 = vrcp.pop %v887
  %v924 = vmul.f32 1.0, %v923
  %v925 = vrcp.pop %v888
  %v926 = vmul.f32 1.0, %v925
  %v927 = vrcp.pop %v889
  %v928 = vmul.f32 1.0, %v927
  %v929 = vrcp.pop %v890
  %v930 = vmul.f32 1.0, %v929
  %v931 = vrcp.pop %v891
  %v932 = vmul.f32 1.0, %v931
  %v933 = vrcp.pop %v892
  %v934 = vmul.f32 1.0, %v933
  %v935 = vrcp.pop %v893
  %v936 = vmul.f32 1.0, %v935
  %v937 = vrcp.pop %v894
  %v938 = vmul.f32 1.0, %v937
  %v939 = vrcp.pop %v895
  %v940 = vmul.f32 1.0, %v939
  %v941 = vrcp.pop %v896
  %v942 = vmul.f32 1.0, %v941
  %v943 = vrcp.pop %v897
  %v944 = vmul.f32 1.0, %v943
  %v945 = vrcp.pop %v898
  %v946 = vmul.f32 1.0, %v945
  %v947 = vrcp.pop %v899
  %v948 = vmul.f32 1.0, %v947
  %v949 = vrcp.pop %v900
  %v950 = vmul.f32 1.0, %v949
  %v951 = vrcp.pop %v901
  %v952 = vmul.f32 1.0, %v951
  %v953 = vrcp.pop %v902
  %v954 = vmul.f32 1.0, %v953
  %v955 = vrcp.pop %v903
  %v956 = vmul.f32 1.0, %v955
  %v957 = vrcp.pop %v904
  %v958 = vmul.f32 1.0, %v957
  %v959 = vrcp.pop %v905
  %v960 = vmul.f32 1.0, %v959
  %v961 = vrcp.pop %v906
  %v962 = vmul.f32 1.0, %v961
  %v963 = vrcp.pop %v907
  %v964 = vmul.f32 1.0, %v963
  %v965 = vrcp.pop %v908
  %v966 = vmul.f32 1.0, %v965
  %v967 = vrcp.pop %v909
  %v968 = vmul.f32 1.0, %v967
  %v969 = vrcp.pop %v910
  %v970 = vmul.f32 1.0, %v969
  %v971 = vrcp.pop %v911
  %v972 = vmul.f32 1.0, %v971
  %v973 = vrcp.pop %v912
  %v974 = vmul.f32 1.0, %v973
  %v975 = vrcp.pop %v913
  %v976 = vmul.f32 1.0, %v975
  %v977 = vrcp.pop %v914
  %v978 = vmul.f32 1.0, %v977
  %980 = vset.pattern.permute.xlu0 0
  %981 = vperm.xlu0 %980, %v916
  %v982 = vpop.permute.xlu0 %981
  %985 = vset.pattern.permute.xlu0 0
  %986 = vperm.xlu0 %985, %v918
  %v987 = vpop.permute.xlu0 %986
  %990 = vset.pattern.permute.xlu0 0
  %991 = vperm.xlu0 %990, %v920
  %v992 = vpop.permute.xlu0 %991
  %995 = vset.pattern.permute.xlu0 0
  %996 = vperm.xlu0 %995, %v922
  %v997 = vpop.permute.xlu0 %996
  %1000 = vset.pattern.permute.xlu0 0
  %1001 = vperm.xlu0 %1000, %v924
  %v1002 = vpop.permute.xlu0 %1001
  %1005 = vset.pattern.permute.xlu0 0
  %1006 = vperm.xlu0 %1005, %v926
  %v1007 = vpop.permute.xlu0 %1006
  %1010 = vset.pattern.permute.xlu0 0
  %1011 = vperm.xlu0 %1010, %v928
  %v1012 = vpop.permute.xlu0 %1011
  %1015 = vset.pattern.permute.xlu0 0
  %1016 = vperm.xlu0 %1015, %v930
  %v1017 = vpop.permute.xlu0 %1016
  %1020 = vset.pattern.permute.xlu0 0
  %1021 = vperm.xlu0 %1020, %v932
  %v1022 = vpop.permute.xlu0 %1021
  %1025 = vset.pattern.permute.xlu0 0
  %1026 = vperm.xlu0 %1025, %v934
  %v1027 = vpop.permute.xlu0 %1026
  %1030 = vset.pattern.permute.xlu0 0
  %1031 = vperm.xlu0 %1030, %v936
  %v1032 = vpop.permute.xlu0 %1031
  %1035 = vset.pattern.permute.xlu0 0
  %1036 = vperm.xlu0 %1035, %v938
  %v1037 = vpop.permute.xlu0 %1036
  %1040 = vset.pattern.permute.xlu0 0
  %1041 = vperm.xlu0 %1040, %v940
  %v1042 = vpop.permute.xlu0 %1041
  %1045 = vset.pattern.permute.xlu0 0
  %1046 = vperm.xlu0 %1045, %v942
  %v1047 = vpop.permute.xlu0 %1046
  %1050 = vset.pattern.permute.xlu0 0
  %1051 = vperm.xlu0 %1050, %v944
  %v1052 = vpop.permute.xlu0 %1051
  %1055 = vset.pattern.permute.xlu0 0
  %1056 = vperm.xlu0 %1055, %v946
  %v1057 = vpop.permute.xlu0 %1056
  %1060 = vset.pattern.permute.xlu0 0
  %1061 = vperm.xlu0 %1060, %v948
  %v1062 = vpop.permute.xlu0 %1061
  %1065 = vset.pattern.permute.xlu0 0
  %1066 = vperm.xlu0 %1065, %v950
  %v1067 = vpop.permute.xlu0 %1066
  %1070 = vset.pattern.permute.xlu0 0
  %1071 = vperm.xlu0 %1070, %v952
  %v1072 = vpop.permute.xlu0 %1071
  %1075 = vset.pattern.permute.xlu0 0
  %1076 = vperm.xlu0 %1075, %v954
  %v1077 = vpop.permute.xlu0 %1076
  %1080 = vset.pattern.permute.xlu0 0
  %1081 = vperm.xlu0 %1080, %v956
  %v1082 = vpop.permute.xlu0 %1081
  %1085 = vset.pattern.permute.xlu0 0
  %1086 = vperm.xlu0 %1085, %v958
  %v1087 = vpop.permute.xlu0 %1086
  %1090 = vset.pattern.permute.xlu0 0
  %1091 = vperm.xlu0 %1090, %v960
  %v1092 = vpop.permute.xlu0 %1091
  %1095 = vset.pattern.permute.xlu0 0
  %1096 = vperm.xlu0 %1095, %v962
  %v1097 = vpop.permute.xlu0 %1096
  %1100 = vset.pattern.permute.xlu0 0
  %1101 = vperm.xlu0 %1100, %v964
  %v1102 = vpop.permute.xlu0 %1101
  %1105 = vset.pattern.permute.xlu0 0
  %1106 = vperm.xlu0 %1105, %v966
  %v1107 = vpop.permute.xlu0 %1106
  %1110 = vset.pattern.permute.xlu0 0
  %1111 = vperm.xlu0 %1110, %v968
  %v1112 = vpop.permute.xlu0 %1111
  %1115 = vset.pattern.permute.xlu0 0
  %1116 = vperm.xlu0 %1115, %v970
  %v1117 = vpop.permute.xlu0 %1116
  %1120 = vset.pattern.permute.xlu0 0
  %1121 = vperm.xlu0 %1120, %v972
  %v1122 = vpop.permute.xlu0 %1121
  %1125 = vset.pattern.permute.xlu0 0
  %1126 = vperm.xlu0 %1125, %v974
  %v1127 = vpop.permute.xlu0 %1126
  %1130 = vset.pattern.permute.xlu0 0
  %1131 = vperm.xlu0 %1130, %v976
  %v1132 = vpop.permute.xlu0 %1131
  %1135 = vset.pattern.permute.xlu0 0
  %1136 = vperm.xlu0 %1135, %v978
  %v1137 = vpop.permute.xlu0 %1136
  %v1139 = vmul.f32 %v982, %v435
  %v1140 = vmul.f32 %v987, %v441
  %v1141 = vmul.f32 %v992, %v447
  %v1142 = vmul.f32 %v997, %v453
  %v1143 = vmul.f32 %v1002, %v459
  %v1144 = vmul.f32 %v1007, %v465
  %v1145 = vmul.f32 %v1012, %v471
  %v1146 = vmul.f32 %v1017, %v477
  %v1147 = vmul.f32 %v1022, %v483
  %v1148 = vmul.f32 %v1027, %v489
  %v1149 = vmul.f32 %v1032, %v495
  %v1150 = vmul.f32 %v1037, %v501
  %v1151 = vmul.f32 %v1042, %v507
  %v1152 = vmul.f32 %v1047, %v513
  %v1153 = vmul.f32 %v1052, %v519
  %v1154 = vmul.f32 %v1057, %v525
  %v1155 = vmul.f32 %v1062, %v531
  %v1156 = vmul.f32 %v1067, %v537
  %v1157 = vmul.f32 %v1072, %v543
  %v1158 = vmul.f32 %v1077, %v549
  %v1159 = vmul.f32 %v1082, %v555
  %v1160 = vmul.f32 %v1087, %v561
  %v1161 = vmul.f32 %v1092, %v567
  %v1162 = vmul.f32 %v1097, %v573
  %v1163 = vmul.f32 %v1102, %v579
  %v1164 = vmul.f32 %v1107, %v585
  %v1165 = vmul.f32 %v1112, %v591
  %v1166 = vmul.f32 %v1117, %v597
  %v1167 = vmul.f32 %v1122, %v603
  %v1168 = vmul.f32 %v1127, %v609
  %v1169 = vmul.f32 %v1132, %v615
  %v1170 = vmul.f32 %v1137, %v621
  %v1171 = vsub.f32 1.0, %v916
  %v1172 = vsub.f32 1.0, %v918
  %v1173 = vsub.f32 1.0, %v920
  %v1174 = vsub.f32 1.0, %v922
  %v1175 = vsub.f32 1.0, %v924
  %v1176 = vsub.f32 1.0, %v926
  %v1177 = vsub.f32 1.0, %v928
  %v1178 = vsub.f32 1.0, %v930
  %v1179 = vsub.f32 1.0, %v932
  %v1180 = vsub.f32 1.0, %v934
  %v1181 = vsub.f32 1.0, %v936
  %v1182 = vsub.f32 1.0, %v938
  %v1183 = vsub.f32 1.0, %v940
  %v1184 = vsub.f32 1.0, %v942
  %v1185 = vsub.f32 1.0, %v944
  %v1186 = vsub.f32 1.0, %v946
  %v1187 = vsub.f32 1.0, %v948
  %v1188 = vsub.f32 1.0, %v950
  %v1189 = vsub.f32 1.0, %v952
  %v1190 = vsub.f32 1.0, %v954
  %v1191 = vsub.f32 1.0, %v956
  %v1192 = vsub.f32 1.0, %v958
  %v1193 = vsub.f32 1.0, %v960
  %v1194 = vsub.f32 1.0, %v962
  %v1195 = vsub.f32 1.0, %v964
  %v1196 = vsub.f32 1.0, %v966
  %v1197 = vsub.f32 1.0, %v968
  %v1198 = vsub.f32 1.0, %v970
  %v1199 = vsub.f32 1.0, %v972
  %v1200 = vsub.f32 1.0, %v974
  %v1201 = vsub.f32 1.0, %v976
  %v1202 = vsub.f32 1.0, %v978
  %1204 = vset.pattern.permute.xlu0 0
  %1205 = vperm.xlu0 %1204, %v1171
  %v1206 = vpop.permute.xlu0 %1205
  %1209 = vset.pattern.permute.xlu0 0
  %1210 = vperm.xlu0 %1209, %v1172
  %v1211 = vpop.permute.xlu0 %1210
  %1214 = vset.pattern.permute.xlu0 0
  %1215 = vperm.xlu0 %1214, %v1173
  %v1216 = vpop.permute.xlu0 %1215
  %1219 = vset.pattern.permute.xlu0 0
  %1220 = vperm.xlu0 %1219, %v1174
  %v1221 = vpop.permute.xlu0 %1220
  %1224 = vset.pattern.permute.xlu0 0
  %1225 = vperm.xlu0 %1224, %v1175
  %v1226 = vpop.permute.xlu0 %1225
  %1229 = vset.pattern.permute.xlu0 0
  %1230 = vperm.xlu0 %1229, %v1176
  %v1231 = vpop.permute.xlu0 %1230
  %1234 = vset.pattern.permute.xlu0 0
  %1235 = vperm.xlu0 %1234, %v1177
  %v1236 = vpop.permute.xlu0 %1235
  %1239 = vset.pattern.permute.xlu0 0
  %1240 = vperm.xlu0 %1239, %v1178
  %v1241 = vpop.permute.xlu0 %1240
  %1244 = vset.pattern.permute.xlu0 0
  %1245 = vperm.xlu0 %1244, %v1179
  %v1246 = vpop.permute.xlu0 %1245
  %1249 = vset.pattern.permute.xlu0 0
  %1250 = vperm.xlu0 %1249, %v1180
  %v1251 = vpop.permute.xlu0 %1250
  %1254 = vset.pattern.permute.xlu0 0
  %1255 = vperm.xlu0 %1254, %v1181
  %v1256 = vpop.permute.xlu0 %1255
  %1259 = vset.pattern.permute.xlu0 0
  %1260 = vperm.xlu0 %1259, %v1182
  %v1261 = vpop.permute.xlu0 %1260
  %1264 = vset.pattern.permute.xlu0 0
  %1265 = vperm.xlu0 %1264, %v1183
  %v1266 = vpop.permute.xlu0 %1265
  %1269 = vset.pattern.permute.xlu0 0
  %1270 = vperm.xlu0 %1269, %v1184
  %v1271 = vpop.permute.xlu0 %1270
  %1274 = vset.pattern.permute.xlu0 0
  %1275 = vperm.xlu0 %1274, %v1185
  %v1276 = vpop.permute.xlu0 %1275
  %1279 = vset.pattern.permute.xlu0 0
  %1280 = vperm.xlu0 %1279, %v1186
  %v1281 = vpop.permute.xlu0 %1280
  %1284 = vset.pattern.permute.xlu0 0
  %1285 = vperm.xlu0 %1284, %v1187
  %v1286 = vpop.permute.xlu0 %1285
  %1289 = vset.pattern.permute.xlu0 0
  %1290 = vperm.xlu0 %1289, %v1188
  %v1291 = vpop.permute.xlu0 %1290
  %1294 = vset.pattern.permute.xlu0 0
  %1295 = vperm.xlu0 %1294, %v1189
  %v1296 = vpop.permute.xlu0 %1295
  %1299 = vset.pattern.permute.xlu0 0
  %1300 = vperm.xlu0 %1299, %v1190
  %v1301 = vpop.permute.xlu0 %1300
  %1304 = vset.pattern.permute.xlu0 0
  %1305 = vperm.xlu0 %1304, %v1191
  %v1306 = vpop.permute.xlu0 %1305
  %1309 = vset.pattern.permute.xlu0 0
  %1310 = vperm.xlu0 %1309, %v1192
  %v1311 = vpop.permute.xlu0 %1310
  %1314 = vset.pattern.permute.xlu0 0
  %1315 = vperm.xlu0 %1314, %v1193
  %v1316 = vpop.permute.xlu0 %1315
  %1319 = vset.pattern.permute.xlu0 0
  %1320 = vperm.xlu0 %1319, %v1194
  %v1321 = vpop.permute.xlu0 %1320
  %1324 = vset.pattern.permute.xlu0 0
  %1325 = vperm.xlu0 %1324, %v1195
  %v1326 = vpop.permute.xlu0 %1325
  %1329 = vset.pattern.permute.xlu0 0
  %1330 = vperm.xlu0 %1329, %v1196
  %v1331 = vpop.permute.xlu0 %1330
  %1334 = vset.pattern.permute.xlu0 0
  %1335 = vperm.xlu0 %1334, %v1197
  %v1336 = vpop.permute.xlu0 %1335
  %1339 = vset.pattern.permute.xlu0 0
  %1340 = vperm.xlu0 %1339, %v1198
  %v1341 = vpop.permute.xlu0 %1340
  %1344 = vset.pattern.permute.xlu0 0
  %1345 = vperm.xlu0 %1344, %v1199
  %v1346 = vpop.permute.xlu0 %1345
  %1349 = vset.pattern.permute.xlu0 0
  %1350 = vperm.xlu0 %1349, %v1200
  %v1351 = vpop.permute.xlu0 %1350
  %1354 = vset.pattern.permute.xlu0 0
  %1355 = vperm.xlu0 %1354, %v1201
  %v1356 = vpop.permute.xlu0 %1355
  %1359 = vset.pattern.permute.xlu0 0
  %1360 = vperm.xlu0 %1359, %v1202
  %v1361 = vpop.permute.xlu0 %1360
  %v1363 = vmul.f32 %v1206, %v17
  %v1364 = vmul.f32 %v1211, %v18
  %v1365 = vmul.f32 %v1216, %v19
  %v1366 = vmul.f32 %v1221, %v20
  %v1367 = vmul.f32 %v1226, %v21
  %v1368 = vmul.f32 %v1231, %v22
  %v1369 = vmul.f32 %v1236, %v23
  %v1370 = vmul.f32 %v1241, %v24
  %v1371 = vmul.f32 %v1246, %v25
  %v1372 = vmul.f32 %v1251, %v26
  %v1373 = vmul.f32 %v1256, %v27
  %v1374 = vmul.f32 %v1261, %v28
  %v1375 = vmul.f32 %v1266, %v29
  %v1376 = vmul.f32 %v1271, %v30
  %v1377 = vmul.f32 %v1276, %v31
  %v1378 = vmul.f32 %v1281, %v32
  %v1379 = vmul.f32 %v1286, %v33
  %v1380 = vmul.f32 %v1291, %v34
  %v1381 = vmul.f32 %v1296, %v35
  %v1382 = vmul.f32 %v1301, %v36
  %v1383 = vmul.f32 %v1306, %v37
  %v1384 = vmul.f32 %v1311, %v38
  %v1385 = vmul.f32 %v1316, %v39
  %v1386 = vmul.f32 %v1321, %v40
  %v1387 = vmul.f32 %v1326, %v41
  %v1388 = vmul.f32 %v1331, %v42
  %v1389 = vmul.f32 %v1336, %v43
  %v1390 = vmul.f32 %v1341, %v44
  %v1391 = vmul.f32 %v1346, %v45
  %v1392 = vmul.f32 %v1351, %v46
  %v1393 = vmul.f32 %v1356, %v47
  %v1394 = vmul.f32 %v1361, %v48
  %s1395 = scalar_lea.vmem %s2, 128
  %v1396 = vld [vmem:[%s1395] sm:$0xff]
  %v1397 = vld [vmem:[%s1395 + $0x8] sm:$0xff]
  %v1398 = vld [vmem:[%s1395 + $0x10] sm:$0xff]
  %v1399 = vld [vmem:[%s1395 + $0x18] sm:$0xff]
  %v1400 = vld [vmem:[%s1395 + $0x20] sm:$0xff]
  %v1401 = vld [vmem:[%s1395 + $0x28] sm:$0xff]
  %v1402 = vld [vmem:[%s1395 + $0x30] sm:$0xff]
  %v1403 = vld [vmem:[%s1395 + $0x38] sm:$0xff]
  %v1404 = vld [vmem:[%s1395 + $0x40] sm:$0xff]
  %v1405 = vld [vmem:[%s1395 + $0x48] sm:$0xff]
  %v1406 = vld [vmem:[%s1395 + $0x50] sm:$0xff]
  %v1407 = vld [vmem:[%s1395 + $0x58] sm:$0xff]
  %v1408 = vld [vmem:[%s1395 + $0x60] sm:$0xff]
  %v1409 = vld [vmem:[%s1395 + $0x68] sm:$0xff]
  %v1410 = vld [vmem:[%s1395 + $0x70] sm:$0xff]
  %v1411 = vld [vmem:[%s1395 + $0x78] sm:$0xff]
  %s1412 = scalar_lea.vmem %s2, 256
  %v1413 = vld [vmem:[%s1412] sm:$0xff]
  %v1414 = vld [vmem:[%s1412 + $0x8] sm:$0xff]
  %v1415 = vld [vmem:[%s1412 + $0x10] sm:$0xff]
  %v1416 = vld [vmem:[%s1412 + $0x18] sm:$0xff]
  %v1417 = vld [vmem:[%s1412 + $0x20] sm:$0xff]
  %v1418 = vld [vmem:[%s1412 + $0x28] sm:$0xff]
  %v1419 = vld [vmem:[%s1412 + $0x30] sm:$0xff]
  %v1420 = vld [vmem:[%s1412 + $0x38] sm:$0xff]
  %v1421 = vld [vmem:[%s1412 + $0x40] sm:$0xff]
  %v1422 = vld [vmem:[%s1412 + $0x48] sm:$0xff]
  %v1423 = vld [vmem:[%s1412 + $0x50] sm:$0xff]
  %v1424 = vld [vmem:[%s1412 + $0x58] sm:$0xff]
  %v1425 = vld [vmem:[%s1412 + $0x60] sm:$0xff]
  %v1426 = vld [vmem:[%s1412 + $0x68] sm:$0xff]
  %v1427 = vld [vmem:[%s1412 + $0x70] sm:$0xff]
  %v1428 = vld [vmem:[%s1412 + $0x78] sm:$0xff]
  %1429 = vmatprep.subr.mxu0 0.0
  %1430 = vmatpush1.msra.mxu0 %v1428
  %1431 = vmatprep.subr.mxu0 0.0
  %1432 = vmatpush1.msra.mxu0 %v1427
  %1433 = vmatprep.subr.mxu0 0.0
  %1434 = vmatpush1.msra.mxu0 %v1426
  %1435 = vmatprep.subr.mxu0 0.0
  %1436 = vmatpush1.msra.mxu0 %v1425
  %1437 = vmatprep.subr.mxu0 0.0
  %1438 = vmatpush1.msra.mxu0 %v1424
  %1439 = vmatprep.subr.mxu0 0.0
  %1440 = vmatpush1.msra.mxu0 %v1423
  %1441 = vmatprep.subr.mxu0 0.0
  %1442 = vmatpush1.msra.mxu0 %v1422
  %1443 = vmatprep.subr.mxu0 0.0
  %1444 = vmatpush1.msra.mxu0 %v1421
  %1445 = vmatprep.subr.mxu0 0.0
  %1446 = vmatpush1.msra.mxu0 %v1420
  %1447 = vmatprep.subr.mxu0 0.0
  %1448 = vmatpush1.msra.mxu0 %v1419
  %1449 = vmatprep.subr.mxu0 0.0
  %1450 = vmatpush1.msra.mxu0 %v1418
  %1451 = vmatprep.subr.mxu0 0.0
  %1452 = vmatpush1.msra.mxu0 %v1417
  %1453 = vmatprep.subr.mxu0 0.0
  %1454 = vmatpush1.msra.mxu0 %v1416
  %1455 = vmatprep.subr.mxu0 0.0
  %1456 = vmatpush1.msra.mxu0 %v1415
  %1457 = vmatprep.subr.mxu0 0.0
  %1458 = vmatpush1.msra.mxu0 %v1414
  %1459 = vmatprep.subr.mxu0 0.0
  %1460 = vmatpush1.msra.mxu0 %v1413
  %1461 = vmatprep.subr.mxu0 0.0
  %1462 = vmatpush2.msra.mxu0 0.0
  %1463 = vmatprep.subr.mxu0 0.0
  %1464 = vmatpush2.msra.mxu0 0.0
  %1465 = vmatprep.subr.mxu0 0.0
  %1466 = vmatpush2.msra.mxu0 0.0
  %1467 = vmatprep.subr.mxu0 0.0
  %1468 = vmatpush2.msra.mxu0 0.0
  %1469 = vmatprep.subr.mxu0 0.0
  %1470 = vmatpush2.msra.mxu0 0.0
  %1471 = vmatprep.subr.mxu0 0.0
  %1472 = vmatpush2.msra.mxu0 0.0
  %1473 = vmatprep.subr.mxu0 0.0
  %1474 = vmatpush2.msra.mxu0 0.0
  %1475 = vmatprep.subr.mxu0 0.0
  %1476 = vmatpush2.msra.mxu0 0.0
  %1477 = vmatprep.subr.mxu0 0.0
  %1478 = vmatpush2.msra.mxu0 0.0
  %1479 = vmatprep.subr.mxu0 0.0
  %1480 = vmatpush2.msra.mxu0 0.0
  %1481 = vmatprep.subr.mxu0 0.0
  %1482 = vmatpush2.msra.mxu0 0.0
  %1483 = vmatprep.subr.mxu0 0.0
  %1484 = vmatpush2.msra.mxu0 0.0
  %1485 = vmatprep.subr.mxu0 0.0
  %1486 = vmatpush2.msra.mxu0 0.0
  %1487 = vmatprep.subr.mxu0 0.0
  %1488 = vmatpush2.msra.mxu0 0.0
  %1489 = vmatprep.subr.mxu0 0.0
  %1490 = vmatpush2.msra.mxu0 0.0
  %1491 = vmatprep.subr.mxu0 0.0
  %1492 = vmatpush2.msra.mxu0 0.0
  %1493 = vmatprep.mubr.f32.mxu0 0.0
  %1494 = vmatmul.mubr.f32.gmra.mxu0 %v1363
  %v1495 = vpop.f32.mrf.mxu0
  %v1496 = vadd.f32 0.0, %v1495
  %v1497 = vpop.f32.mrf.mxu0
  %1498 = vmatprep.mubr.f32.mxu0 0.0
  %1499 = vmatmul.mubr.f32.gmra.mxu0 %v1364
  %v1500 = vpop.f32.mrf.mxu0
  %v1501 = vadd.f32 0.0, %v1500
  %v1502 = vpop.f32.mrf.mxu0
  %1503 = vmatprep.mubr.f32.mxu0 0.0
  %1504 = vmatmul.mubr.f32.gmra.mxu0 %v1365
  %v1505 = vpop.f32.mrf.mxu0
  %v1506 = vadd.f32 0.0, %v1505
  %v1507 = vpop.f32.mrf.mxu0
  %1508 = vmatprep.mubr.f32.mxu0 0.0
  %1509 = vmatmul.mubr.f32.gmra.mxu0 %v1366
  %v1510 = vpop.f32.mrf.mxu0
  %v1511 = vadd.f32 0.0, %v1510
  %v1512 = vpop.f32.mrf.mxu0
  %1513 = vmatprep.mubr.f32.mxu0 0.0
  %1514 = vmatmul.mubr.f32.gmra.mxu0 %v1367
  %v1515 = vpop.f32.mrf.mxu0
  %v1516 = vadd.f32 0.0, %v1515
  %v1517 = vpop.f32.mrf.mxu0
  %1518 = vmatprep.mubr.f32.mxu0 0.0
  %1519 = vmatmul.mubr.f32.gmra.mxu0 %v1368
  %v1520 = vpop.f32.mrf.mxu0
  %v1521 = vadd.f32 0.0, %v1520
  %v1522 = vpop.f32.mrf.mxu0
  %1523 = vmatprep.mubr.f32.mxu0 0.0
  %1524 = vmatmul.mubr.f32.gmra.mxu0 %v1369
  %v1525 = vpop.f32.mrf.mxu0
  %v1526 = vadd.f32 0.0, %v1525
  %v1527 = vpop.f32.mrf.mxu0
  %1528 = vmatprep.mubr.f32.mxu0 0.0
  %1529 = vmatmul.mubr.f32.gmra.mxu0 %v1370
  %v1530 = vpop.f32.mrf.mxu0
  %v1531 = vadd.f32 0.0, %v1530
  %v1532 = vpop.f32.mrf.mxu0
  %1533 = vmatprep.mubr.f32.mxu0 0.0
  %1534 = vmatmul.mubr.f32.gmra.mxu0 %v1371
  %v1535 = vpop.f32.mrf.mxu0
  %v1536 = vadd.f32 0.0, %v1535
  %v1537 = vpop.f32.mrf.mxu0
  %1538 = vmatprep.mubr.f32.mxu0 0.0
  %1539 = vmatmul.mubr.f32.gmra.mxu0 %v1372
  %v1540 = vpop.f32.mrf.mxu0
  %v1541 = vadd.f32 0.0, %v1540
  %v1542 = vpop.f32.mrf.mxu0
  %1543 = vmatprep.mubr.f32.mxu0 0.0
  %1544 = vmatmul.mubr.f32.gmra.mxu0 %v1373
  %v1545 = vpop.f32.mrf.mxu0
  %v1546 = vadd.f32 0.0, %v1545
  %v1547 = vpop.f32.mrf.mxu0
  %1548 = vmatprep.mubr.f32.mxu0 0.0
  %1549 = vmatmul.mubr.f32.gmra.mxu0 %v1374
  %v1550 = vpop.f32.mrf.mxu0
  %v1551 = vadd.f32 0.0, %v1550
  %v1552 = vpop.f32.mrf.mxu0
  %1553 = vmatprep.mubr.f32.mxu0 0.0
  %1554 = vmatmul.mubr.f32.gmra.mxu0 %v1375
  %v1555 = vpop.f32.mrf.mxu0
  %v1556 = vadd.f32 0.0, %v1555
  %v1557 = vpop.f32.mrf.mxu0
  %1558 = vmatprep.mubr.f32.mxu0 0.0
  %1559 = vmatmul.mubr.f32.gmra.mxu0 %v1376
  %v1560 = vpop.f32.mrf.mxu0
  %v1561 = vadd.f32 0.0, %v1560
  %v1562 = vpop.f32.mrf.mxu0
  %1563 = vmatprep.mubr.f32.mxu0 0.0
  %1564 = vmatmul.mubr.f32.gmra.mxu0 %v1377
  %v1565 = vpop.f32.mrf.mxu0
  %v1566 = vadd.f32 0.0, %v1565
  %v1567 = vpop.f32.mrf.mxu0
  %1568 = vmatprep.mubr.f32.mxu0 0.0
  %1569 = vmatmul.mubr.f32.gmra.mxu0 %v1378
  %v1570 = vpop.f32.mrf.mxu0
  %v1571 = vadd.f32 0.0, %v1570
  %v1572 = vpop.f32.mrf.mxu0
  %1573 = vmatprep.mubr.f32.mxu0 0.0
  %1574 = vmatmul.mubr.f32.gmra.mxu0 %v1379
  %v1575 = vpop.f32.mrf.mxu0
  %v1576 = vadd.f32 0.0, %v1575
  %v1577 = vpop.f32.mrf.mxu0
  %1578 = vmatprep.mubr.f32.mxu0 0.0
  %1579 = vmatmul.mubr.f32.gmra.mxu0 %v1380
  %v1580 = vpop.f32.mrf.mxu0
  %v1581 = vadd.f32 0.0, %v1580
  %v1582 = vpop.f32.mrf.mxu0
  %1583 = vmatprep.mubr.f32.mxu0 0.0
  %1584 = vmatmul.mubr.f32.gmra.mxu0 %v1381
  %v1585 = vpop.f32.mrf.mxu0
  %v1586 = vadd.f32 0.0, %v1585
  %v1587 = vpop.f32.mrf.mxu0
  %1588 = vmatprep.mubr.f32.mxu0 0.0
  %1589 = vmatmul.mubr.f32.gmra.mxu0 %v1382
  %v1590 = vpop.f32.mrf.mxu0
  %v1591 = vadd.f32 0.0, %v1590
  %v1592 = vpop.f32.mrf.mxu0
  %1593 = vmatprep.mubr.f32.mxu0 0.0
  %1594 = vmatmul.mubr.f32.gmra.mxu0 %v1383
  %v1595 = vpop.f32.mrf.mxu0
  %v1596 = vadd.f32 0.0, %v1595
  %v1597 = vpop.f32.mrf.mxu0
  %1598 = vmatprep.mubr.f32.mxu0 0.0
  %1599 = vmatmul.mubr.f32.gmra.mxu0 %v1384
  %v1600 = vpop.f32.mrf.mxu0
  %v1601 = vadd.f32 0.0, %v1600
  %v1602 = vpop.f32.mrf.mxu0
  %1603 = vmatprep.mubr.f32.mxu0 0.0
  %1604 = vmatmul.mubr.f32.gmra.mxu0 %v1385
  %v1605 = vpop.f32.mrf.mxu0
  %v1606 = vadd.f32 0.0, %v1605
  %v1607 = vpop.f32.mrf.mxu0
  %1608 = vmatprep.mubr.f32.mxu0 0.0
  %1609 = vmatmul.mubr.f32.gmra.mxu0 %v1386
  %v1610 = vpop.f32.mrf.mxu0
  %v1611 = vadd.f32 0.0, %v1610
  %v1612 = vpop.f32.mrf.mxu0
  %1613 = vmatprep.mubr.f32.mxu0 0.0
  %1614 = vmatmul.mubr.f32.gmra.mxu0 %v1387
  %v1615 = vpop.f32.mrf.mxu0
  %v1616 = vadd.f32 0.0, %v1615
  %v1617 = vpop.f32.mrf.mxu0
  %1618 = vmatprep.mubr.f32.mxu0 0.0
  %1619 = vmatmul.mubr.f32.gmra.mxu0 %v1388
  %v1620 = vpop.f32.mrf.mxu0
  %v1621 = vadd.f32 0.0, %v1620
  %v1622 = vpop.f32.mrf.mxu0
  %1623 = vmatprep.mubr.f32.mxu0 0.0
  %1624 = vmatmul.mubr.f32.gmra.mxu0 %v1389
  %v1625 = vpop.f32.mrf.mxu0
  %v1626 = vadd.f32 0.0, %v1625
  %v1627 = vpop.f32.mrf.mxu0
  %1628 = vmatprep.mubr.f32.mxu0 0.0
  %1629 = vmatmul.mubr.f32.gmra.mxu0 %v1390
  %v1630 = vpop.f32.mrf.mxu0
  %v1631 = vadd.f32 0.0, %v1630
  %v1632 = vpop.f32.mrf.mxu0
  %1633 = vmatprep.mubr.f32.mxu0 0.0
  %1634 = vmatmul.mubr.f32.gmra.mxu0 %v1391
  %v1635 = vpop.f32.mrf.mxu0
  %v1636 = vadd.f32 0.0, %v1635
  %v1637 = vpop.f32.mrf.mxu0
  %1638 = vmatprep.mubr.f32.mxu0 0.0
  %1639 = vmatmul.mubr.f32.gmra.mxu0 %v1392
  %v1640 = vpop.f32.mrf.mxu0
  %v1641 = vadd.f32 0.0, %v1640
  %v1642 = vpop.f32.mrf.mxu0
  %1643 = vmatprep.mubr.f32.mxu0 0.0
  %1644 = vmatmul.mubr.f32.gmra.mxu0 %v1393
  %v1645 = vpop.f32.mrf.mxu0
  %v1646 = vadd.f32 0.0, %v1645
  %v1647 = vpop.f32.mrf.mxu0
  %1648 = vmatprep.mubr.f32.mxu0 0.0
  %1649 = vmatmul.mubr.f32.gmra.mxu0 %v1394
  %v1650 = vpop.f32.mrf.mxu0
  %v1651 = vadd.f32 0.0, %v1650
  %v1652 = vpop.f32.mrf.mxu0
  %1653 = vdwg.mxu0
  %1654 = vmatprep.subr.mxu0 0.0
  %1655 = vmatpush1.msra.mxu0 %v1411
  %1656 = vmatprep.subr.mxu0 0.0
  %1657 = vmatpush1.msra.mxu0 %v1410
  %1658 = vmatprep.subr.mxu0 0.0
  %1659 = vmatpush1.msra.mxu0 %v1409
  %1660 = vmatprep.subr.mxu0 0.0
  %1661 = vmatpush1.msra.mxu0 %v1408
  %1662 = vmatprep.subr.mxu0 0.0
  %1663 = vmatpush1.msra.mxu0 %v1407
  %1664 = vmatprep.subr.mxu0 0.0
  %1665 = vmatpush1.msra.mxu0 %v1406
  %1666 = vmatprep.subr.mxu0 0.0
  %1667 = vmatpush1.msra.mxu0 %v1405
  %1668 = vmatprep.subr.mxu0 0.0
  %1669 = vmatpush1.msra.mxu0 %v1404
  %1670 = vmatprep.subr.mxu0 0.0
  %1671 = vmatpush1.msra.mxu0 %v1403
  %1672 = vmatprep.subr.mxu0 0.0
  %1673 = vmatpush1.msra.mxu0 %v1402
  %1674 = vmatprep.subr.mxu0 0.0
  %1675 = vmatpush1.msra.mxu0 %v1401
  %1676 = vmatprep.subr.mxu0 0.0
  %1677 = vmatpush1.msra.mxu0 %v1400
  %1678 = vmatprep.subr.mxu0 0.0
  %1679 = vmatpush1.msra.mxu0 %v1399
  %1680 = vmatprep.subr.mxu0 0.0
  %1681 = vmatpush1.msra.mxu0 %v1398
  %1682 = vmatprep.subr.mxu0 0.0
  %1683 = vmatpush1.msra.mxu0 %v1397
  %1684 = vmatprep.subr.mxu0 0.0
  %1685 = vmatpush1.msra.mxu0 %v1396
  %1686 = vmatprep.subr.mxu0 0.0
  %1687 = vmatpush2.msra.mxu0 0.0
  %1688 = vmatprep.subr.mxu0 0.0
  %1689 = vmatpush2.msra.mxu0 0.0
  %1690 = vmatprep.subr.mxu0 0.0
  %1691 = vmatpush2.msra.mxu0 0.0
  %1692 = vmatprep.subr.mxu0 0.0
  %1693 = vmatpush2.msra.mxu0 0.0
  %1694 = vmatprep.subr.mxu0 0.0
  %1695 = vmatpush2.msra.mxu0 0.0
  %1696 = vmatprep.subr.mxu0 0.0
  %1697 = vmatpush2.msra.mxu0 0.0
  %1698 = vmatprep.subr.mxu0 0.0
  %1699 = vmatpush2.msra.mxu0 0.0
  %1700 = vmatprep.subr.mxu0 0.0
  %1701 = vmatpush2.msra.mxu0 0.0
  %1702 = vmatprep.subr.mxu0 0.0
  %1703 = vmatpush2.msra.mxu0 0.0
  %1704 = vmatprep.subr.mxu0 0.0
  %1705 = vmatpush2.msra.mxu0 0.0
  %1706 = vmatprep.subr.mxu0 0.0
  %1707 = vmatpush2.msra.mxu0 0.0
  %1708 = vmatprep.subr.mxu0 0.0
  %1709 = vmatpush2.msra.mxu0 0.0
  %1710 = vmatprep.subr.mxu0 0.0
  %1711 = vmatpush2.msra.mxu0 0.0
  %1712 = vmatprep.subr.mxu0 0.0
  %1713 = vmatpush2.msra.mxu0 0.0
  %1714 = vmatprep.subr.mxu0 0.0
  %1715 = vmatpush2.msra.mxu0 0.0
  %1716 = vmatprep.subr.mxu0 0.0
  %1717 = vmatpush2.msra.mxu0 0.0
  %1718 = vmatprep.mubr.f32.mxu0 0.0
  %1719 = vmatmul.mubr.f32.gmra.mxu0 %v1139
  %v1720 = vpop.f32.mrf.mxu0
  %v1721 = vadd.f32 %v1496, %v1720
  %v1722 = vpop.f32.mrf.mxu0
  %1723 = vmatprep.mubr.f32.mxu0 0.0
  %1724 = vmatmul.mubr.f32.gmra.mxu0 %v1140
  %v1725 = vpop.f32.mrf.mxu0
  %v1726 = vadd.f32 %v1501, %v1725
  %v1727 = vpop.f32.mrf.mxu0
  %1728 = vmatprep.mubr.f32.mxu0 0.0
  %1729 = vmatmul.mubr.f32.gmra.mxu0 %v1141
  %v1730 = vpop.f32.mrf.mxu0
  %v1731 = vadd.f32 %v1506, %v1730
  %v1732 = vpop.f32.mrf.mxu0
  %1733 = vmatprep.mubr.f32.mxu0 0.0
  %1734 = vmatmul.mubr.f32.gmra.mxu0 %v1142
  %v1735 = vpop.f32.mrf.mxu0
  %v1736 = vadd.f32 %v1511, %v1735
  %v1737 = vpop.f32.mrf.mxu0
  %1738 = vmatprep.mubr.f32.mxu0 0.0
  %1739 = vmatmul.mubr.f32.gmra.mxu0 %v1143
  %v1740 = vpop.f32.mrf.mxu0
  %v1741 = vadd.f32 %v1516, %v1740
  %v1742 = vpop.f32.mrf.mxu0
  %1743 = vmatprep.mubr.f32.mxu0 0.0
  %1744 = vmatmul.mubr.f32.gmra.mxu0 %v1144
  %v1745 = vpop.f32.mrf.mxu0
  %v1746 = vadd.f32 %v1521, %v1745
  %v1747 = vpop.f32.mrf.mxu0
  %1748 = vmatprep.mubr.f32.mxu0 0.0
  %1749 = vmatmul.mubr.f32.gmra.mxu0 %v1145
  %v1750 = vpop.f32.mrf.mxu0
  %v1751 = vadd.f32 %v1526, %v1750
  %v1752 = vpop.f32.mrf.mxu0
  %1753 = vmatprep.mubr.f32.mxu0 0.0
  %1754 = vmatmul.mubr.f32.gmra.mxu0 %v1146
  %v1755 = vpop.f32.mrf.mxu0
  %v1756 = vadd.f32 %v1531, %v1755
  %v1757 = vpop.f32.mrf.mxu0
  %1758 = vmatprep.mubr.f32.mxu0 0.0
  %1759 = vmatmul.mubr.f32.gmra.mxu0 %v1147
  %v1760 = vpop.f32.mrf.mxu0
  %v1761 = vadd.f32 %v1536, %v1760
  %v1762 = vpop.f32.mrf.mxu0
  %1763 = vmatprep.mubr.f32.mxu0 0.0
  %1764 = vmatmul.mubr.f32.gmra.mxu0 %v1148
  %v1765 = vpop.f32.mrf.mxu0
  %v1766 = vadd.f32 %v1541, %v1765
  %v1767 = vpop.f32.mrf.mxu0
  %1768 = vmatprep.mubr.f32.mxu0 0.0
  %1769 = vmatmul.mubr.f32.gmra.mxu0 %v1149
  %v1770 = vpop.f32.mrf.mxu0
  %v1771 = vadd.f32 %v1546, %v1770
  %v1772 = vpop.f32.mrf.mxu0
  %1773 = vmatprep.mubr.f32.mxu0 0.0
  %1774 = vmatmul.mubr.f32.gmra.mxu0 %v1150
  %v1775 = vpop.f32.mrf.mxu0
  %v1776 = vadd.f32 %v1551, %v1775
  %v1777 = vpop.f32.mrf.mxu0
  %1778 = vmatprep.mubr.f32.mxu0 0.0
  %1779 = vmatmul.mubr.f32.gmra.mxu0 %v1151
  %v1780 = vpop.f32.mrf.mxu0
  %v1781 = vadd.f32 %v1556, %v1780
  %v1782 = vpop.f32.mrf.mxu0
  %1783 = vmatprep.mubr.f32.mxu0 0.0
  %1784 = vmatmul.mubr.f32.gmra.mxu0 %v1152
  %v1785 = vpop.f32.mrf.mxu0
  %v1786 = vadd.f32 %v1561, %v1785
  %v1787 = vpop.f32.mrf.mxu0
  %1788 = vmatprep.mubr.f32.mxu0 0.0
  %1789 = vmatmul.mubr.f32.gmra.mxu0 %v1153
  %v1790 = vpop.f32.mrf.mxu0
  %v1791 = vadd.f32 %v1566, %v1790
  %v1792 = vpop.f32.mrf.mxu0
  %1793 = vmatprep.mubr.f32.mxu0 0.0
  %1794 = vmatmul.mubr.f32.gmra.mxu0 %v1154
  %v1795 = vpop.f32.mrf.mxu0
  %v1796 = vadd.f32 %v1571, %v1795
  %v1797 = vpop.f32.mrf.mxu0
  %1798 = vmatprep.mubr.f32.mxu0 0.0
  %1799 = vmatmul.mubr.f32.gmra.mxu0 %v1155
  %v1800 = vpop.f32.mrf.mxu0
  %v1801 = vadd.f32 %v1576, %v1800
  %v1802 = vpop.f32.mrf.mxu0
  %1803 = vmatprep.mubr.f32.mxu0 0.0
  %1804 = vmatmul.mubr.f32.gmra.mxu0 %v1156
  %v1805 = vpop.f32.mrf.mxu0
  %v1806 = vadd.f32 %v1581, %v1805
  %v1807 = vpop.f32.mrf.mxu0
  %1808 = vmatprep.mubr.f32.mxu0 0.0
  %1809 = vmatmul.mubr.f32.gmra.mxu0 %v1157
  %v1810 = vpop.f32.mrf.mxu0
  %v1811 = vadd.f32 %v1586, %v1810
  %v1812 = vpop.f32.mrf.mxu0
  %1813 = vmatprep.mubr.f32.mxu0 0.0
  %1814 = vmatmul.mubr.f32.gmra.mxu0 %v1158
  %v1815 = vpop.f32.mrf.mxu0
  %v1816 = vadd.f32 %v1591, %v1815
  %v1817 = vpop.f32.mrf.mxu0
  %1818 = vmatprep.mubr.f32.mxu0 0.0
  %1819 = vmatmul.mubr.f32.gmra.mxu0 %v1159
  %v1820 = vpop.f32.mrf.mxu0
  %v1821 = vadd.f32 %v1596, %v1820
  %v1822 = vpop.f32.mrf.mxu0
  %1823 = vmatprep.mubr.f32.mxu0 0.0
  %1824 = vmatmul.mubr.f32.gmra.mxu0 %v1160
  %v1825 = vpop.f32.mrf.mxu0
  %v1826 = vadd.f32 %v1601, %v1825
  %v1827 = vpop.f32.mrf.mxu0
  %1828 = vmatprep.mubr.f32.mxu0 0.0
  %1829 = vmatmul.mubr.f32.gmra.mxu0 %v1161
  %v1830 = vpop.f32.mrf.mxu0
  %v1831 = vadd.f32 %v1606, %v1830
  %v1832 = vpop.f32.mrf.mxu0
  %1833 = vmatprep.mubr.f32.mxu0 0.0
  %1834 = vmatmul.mubr.f32.gmra.mxu0 %v1162
  %v1835 = vpop.f32.mrf.mxu0
  %v1836 = vadd.f32 %v1611, %v1835
  %v1837 = vpop.f32.mrf.mxu0
  %1838 = vmatprep.mubr.f32.mxu0 0.0
  %1839 = vmatmul.mubr.f32.gmra.mxu0 %v1163
  %v1840 = vpop.f32.mrf.mxu0
  %v1841 = vadd.f32 %v1616, %v1840
  %v1842 = vpop.f32.mrf.mxu0
  %1843 = vmatprep.mubr.f32.mxu0 0.0
  %1844 = vmatmul.mubr.f32.gmra.mxu0 %v1164
  %v1845 = vpop.f32.mrf.mxu0
  %v1846 = vadd.f32 %v1621, %v1845
  %v1847 = vpop.f32.mrf.mxu0
  %1848 = vmatprep.mubr.f32.mxu0 0.0
  %1849 = vmatmul.mubr.f32.gmra.mxu0 %v1165
  %v1850 = vpop.f32.mrf.mxu0
  %v1851 = vadd.f32 %v1626, %v1850
  %v1852 = vpop.f32.mrf.mxu0
  %1853 = vmatprep.mubr.f32.mxu0 0.0
  %1854 = vmatmul.mubr.f32.gmra.mxu0 %v1166
  %v1855 = vpop.f32.mrf.mxu0
  %v1856 = vadd.f32 %v1631, %v1855
  %v1857 = vpop.f32.mrf.mxu0
  %1858 = vmatprep.mubr.f32.mxu0 0.0
  %1859 = vmatmul.mubr.f32.gmra.mxu0 %v1167
  %v1860 = vpop.f32.mrf.mxu0
  %v1861 = vadd.f32 %v1636, %v1860
  %v1862 = vpop.f32.mrf.mxu0
  %1863 = vmatprep.mubr.f32.mxu0 0.0
  %1864 = vmatmul.mubr.f32.gmra.mxu0 %v1168
  %v1865 = vpop.f32.mrf.mxu0
  %v1866 = vadd.f32 %v1641, %v1865
  %v1867 = vpop.f32.mrf.mxu0
  %1868 = vmatprep.mubr.f32.mxu0 0.0
  %1869 = vmatmul.mubr.f32.gmra.mxu0 %v1169
  %v1870 = vpop.f32.mrf.mxu0
  %v1871 = vadd.f32 %v1646, %v1870
  %v1872 = vpop.f32.mrf.mxu0
  %1873 = vmatprep.mubr.f32.mxu0 0.0
  %1874 = vmatmul.mubr.f32.gmra.mxu0 %v1170
  %v1875 = vpop.f32.mrf.mxu0
  %v1876 = vadd.f32 %v1651, %v1875
  %v1877 = vpop.f32.mrf.mxu0
  %1878 = vdwg.mxu0
  %v1879 = vld [vmem:[%s3 + $0x3] ss:$0 sm:$0xff]
  %v1880 = vadd.f32 %v1721, %v1879
  %v1881 = vadd.f32 %v1726, %v1879
  %v1882 = vadd.f32 %v1731, %v1879
  %v1883 = vadd.f32 %v1736, %v1879
  %v1884 = vadd.f32 %v1741, %v1879
  %v1885 = vadd.f32 %v1746, %v1879
  %v1886 = vadd.f32 %v1751, %v1879
  %v1887 = vadd.f32 %v1756, %v1879
  %v1888 = vadd.f32 %v1761, %v1879
  %v1889 = vadd.f32 %v1766, %v1879
  %v1890 = vadd.f32 %v1771, %v1879
  %v1891 = vadd.f32 %v1776, %v1879
  %v1892 = vadd.f32 %v1781, %v1879
  %v1893 = vadd.f32 %v1786, %v1879
  %v1894 = vadd.f32 %v1791, %v1879
  %v1895 = vadd.f32 %v1796, %v1879
  %v1896 = vadd.f32 %v1801, %v1879
  %v1897 = vadd.f32 %v1806, %v1879
  %v1898 = vadd.f32 %v1811, %v1879
  %v1899 = vadd.f32 %v1816, %v1879
  %v1900 = vadd.f32 %v1821, %v1879
  %v1901 = vadd.f32 %v1826, %v1879
  %v1902 = vadd.f32 %v1831, %v1879
  %v1903 = vadd.f32 %v1836, %v1879
  %v1904 = vadd.f32 %v1841, %v1879
  %v1905 = vadd.f32 %v1846, %v1879
  %v1906 = vadd.f32 %v1851, %v1879
  %v1907 = vadd.f32 %v1856, %v1879
  %v1908 = vadd.f32 %v1861, %v1879
  %v1909 = vadd.f32 %v1866, %v1879
  %v1910 = vadd.f32 %v1871, %v1879
  %v1911 = vadd.f32 %v1876, %v1879
  %1912 = vst [vmem:[%s4] sm:$0xff] %v1880
  %1913 = vst [vmem:[%s4 + $0x8] sm:$0xff] %v1881
  %1914 = vst [vmem:[%s4 + $0x10] sm:$0xff] %v1882
  %1915 = vst [vmem:[%s4 + $0x18] sm:$0xff] %v1883
  %1916 = vst [vmem:[%s4 + $0x20] sm:$0xff] %v1884
  %1917 = vst [vmem:[%s4 + $0x28] sm:$0xff] %v1885
  %1918 = vst [vmem:[%s4 + $0x30] sm:$0xff] %v1886
  %1919 = vst [vmem:[%s4 + $0x38] sm:$0xff] %v1887
  %1920 = vst [vmem:[%s4 + $0x40] sm:$0xff] %v1888
  %1921 = vst [vmem:[%s4 + $0x48] sm:$0xff] %v1889
  %1922 = vst [vmem:[%s4 + $0x50] sm:$0xff] %v1890
  %1923 = vst [vmem:[%s4 + $0x58] sm:$0xff] %v1891
  %1924 = vst [vmem:[%s4 + $0x60] sm:$0xff] %v1892
  %1925 = vst [vmem:[%s4 + $0x68] sm:$0xff] %v1893
  %1926 = vst [vmem:[%s4 + $0x70] sm:$0xff] %v1894
  %1927 = vst [vmem:[%s4 + $0x78] sm:$0xff] %v1895
  %1928 = vst [vmem:[%s4 + $0x80] sm:$0xff] %v1896
  %1929 = vst [vmem:[%s4 + $0x88] sm:$0xff] %v1897
  %1930 = vst [vmem:[%s4 + $0x90] sm:$0xff] %v1898
  %1931 = vst [vmem:[%s4 + $0x98] sm:$0xff] %v1899
  %1932 = vst [vmem:[%s4 + $0xa0] sm:$0xff] %v1900
  %1933 = vst [vmem:[%s4 + $0xa8] sm:$0xff] %v1901
  %1934 = vst [vmem:[%s4 + $0xb0] sm:$0xff] %v1902
  %1935 = vst [vmem:[%s4 + $0xb8] sm:$0xff] %v1903
  %1936 = vst [vmem:[%s4 + $0xc0] sm:$0xff] %v1904
  %1937 = vst [vmem:[%s4 + $0xc8] sm:$0xff] %v1905
  %1938 = vst [vmem:[%s4 + $0xd0] sm:$0xff] %v1906
  %1939 = vst [vmem:[%s4 + $0xd8] sm:$0xff] %v1907
  %1940 = vst [vmem:[%s4 + $0xe0] sm:$0xff] %v1908
  %1941 = vst [vmem:[%s4 + $0xe8] sm:$0xff] %v1909
  %1942 = vst [vmem:[%s4 + $0xf0] sm:$0xff] %v1910
  %1943 = vst [vmem:[%s4 + $0xf8] sm:$0xff] %v1911
  // Predicated region
  $region18: #{_forward_impl.1} parent=0 // pred_check
    _
  $region19: #{_forward_impl.1} parent=0 // pred_check_branch
    %1945 = sbr.rel (0) target = $region21
  $region20: #{_forward_impl.1} parent=0 // pred_region
    _
  $region21: #{_forward_impl.1} parent=0 // pred_fallthru
    _
  // Predicated region
  $region22: #{_forward_impl.1} parent=0 // pred_check
    _
  $region23: #{_forward_impl.1} parent=0 // pred_check_branch
    %1947 = sbr.rel (0) target = $region25
  $region24: #{_forward_impl.1} parent=0 // pred_region
    _
  $region25: #{_forward_impl.1} parent=0 // pred_fallthru
    _

</llo_original>
